<compile_context>
chip_gen: v7x
topology: tpu7x:2x2x1
jax: 0.10.0
libtpu: 0.0.40
codegen_flags: <defaults>
</compile_context>

<pallas_src>
import functools

import jax
import jax.numpy as jnp
from jax.experimental import pallas as pl
from jax.experimental.pallas import tpu as pltpu


BN_EPS = 1e-5
LANE = 128


def _round_up(x, m):
    return ((x + m - 1) // m) * m


def _pad2(a, rows, cols):
    return jnp.pad(a, ((0, rows - a.shape[0]), (0, cols - a.shape[1])))


def npbiasnet_kernel(
    drug_ref, cell_ref, np_ref,          # (TB, dp) bf16, (TB, cp) f32, (TB, npd) bf16
    w_de_ref, w_att_ref,                 # drug embedder / attention weights (bf16)
    w_fc_d_ref, w_fc_c_ref,              # fc weight split row-wise (bf16)
    w_cls_ref,                           # classifier Linear with BN folded in (bf16)
    w_fc2_ref,                           # fc2 weight as a (1, h1p) row (bf16)
    bias_ref,                            # packed f32 biases (1, ep+cp+h0p+h1p+128)
    out_ref,                             # (1, TB) f32, lane-dense output row
    *, ep, cp, h0p, h1p,
):
    f32 = jnp.float32
    bf16 = jnp.bfloat16

    # --- unpack the concatenated bias row (static, lane-aligned slices) ---
    o1 = ep
    o2 = o1 + cp
    o3 = o2 + h0p
    o4 = o3 + h1p
    b_de = bias_ref[:, 0:o1]
    b_att = bias_ref[:, o1:o2]
    b_fc = bias_ref[:, o2:o3]
    b_cls = bias_ref[:, o3:o4]
    b_fc2 = bias_ref[:, o4:o4 + 1]       # (1, 1) scalar

    # --- drug_embed_net(drug_x): Linear + ReLU (bf16 MXU operands, f32 acc) ---
    drug_e = jnp.dot(drug_ref[...], w_de_ref[...],
                     preferred_element_type=f32) + b_de
    drug_e = jnp.maximum(drug_e, 0.0).astype(bf16)

    # --- attention_net(np_scores): Linear; cell_x = c_weights + cell_x (f32) ---
    c_w = jnp.dot(np_ref[...], w_att_ref[...],
                  preferred_element_type=f32) + b_att
    cell = (c_w + cell_ref[...]).astype(bf16)
    # TODO(synk): when cell_dim >= hid0, attention_net could be folded into fc
    # at prepare time (W_att @ W_fc_c, fold bias); kept explicit here.

    # --- x = relu(fc(concat(drug_e, cell))): split-row matmul sum ---
    h = (jnp.dot(drug_e, w_fc_d_ref[...], preferred_element_type=f32)
         + jnp.dot(cell, w_fc_c_ref[...], preferred_element_type=f32)
         + b_fc)
    x = jnp.maximum(h, 0.0).astype(bf16)     # cast once; no separate f32 copy kept live

    # --- classifier[0]: Linear (BatchNorm folded into weights) -> ReLU ---
    # TODO(synk): dropout is identity in eval mode; train-mode dropout would need pltpu PRNG.
    y = jnp.dot(x, w_cls_ref[...], preferred_element_type=f32) + b_cls
    x = jnp.maximum(y, 0.0).astype(bf16)

    # --- fc2 (out_features=1): NT matmul -> lane-dense (1, TB) row ---
    out_row = jax.lax.dot_general(
        w_fc2_ref[...], x,
        dimension_numbers=(((1,), (1,)), ((), ())),
        preferred_element_type=f32)          # (1, TB)
    out_ref[...] = out_row + b_fc2


def prepare_params(params, *, weight_dtype=jnp.bfloat16):
    """One-time weight preprocessing (run at param-load time, NOT per forward):
    eval-mode BN fold, lane-aligned zero padding, bf16 casts, bias packing."""
    f32 = jnp.float32
    drug_in, embed_dim = params["w_de"].shape
    np_dim, cell_dim = params["w_att"].shape
    hid0 = params["w_fc_d"].shape[1]
    hid1 = params["w_cls"].shape[1]

    dp = _round_up(drug_in, LANE)
    npd = _round_up(np_dim, LANE)
    cp = _round_up(cell_dim, LANE)
    ep = _round_up(embed_dim, LANE)
    h0p = _round_up(hid0, LANE)
    h1p = _round_up(hid1, LANE)

    # Fold eval-mode BatchNorm1d into the classifier Linear.
    scale = params["bn_g"] * jax.lax.rsqrt(params["bn_v"] + BN_EPS)     # (1, hid1)
    w_cls_f = params["w_cls"] * scale
    b_cls_f = (params["b_cls"] - params["bn_m"]) * scale + params["bn_b"]

    # Biases stay f32, packed into a single lane-aligned row (one DMA).
    bias_packed = jnp.concatenate(
        [
            _pad2(params["b_de"].astype(f32), 1, ep),
            _pad2(params["b_att"].astype(f32), 1, cp),
            _pad2(params["b_fc"].astype(f32), 1, h0p),
            _pad2(b_cls_f.astype(f32), 1, h1p),
            jnp.broadcast_to(params["b_fc2"].astype(f32), (1, LANE)),
        ],
        axis=1,
    )

    return {
        "w_de": _pad2(params["w_de"], dp, ep).astype(weight_dtype),
        "w_att": _pad2(params["w_att"], npd, cp).astype(weight_dtype),
        "w_fc_d": _pad2(params["w_fc_d"], ep, h0p).astype(weight_dtype),
        "w_fc_c": _pad2(params["w_fc_c"], cp, h0p).astype(weight_dtype),
        "w_cls": _pad2(w_cls_f, h0p, h1p).astype(weight_dtype),
        "w_fc2": _pad2(params["w_fc2"].T, 1, h1p).astype(weight_dtype),   # (1, h1p)
        "bias": bias_packed,
        "dims": dict(dp=dp, npd=npd, cp=cp, ep=ep, h0p=h0p, h1p=h1p),
    }


def _pick_batch_tile(batch):
    """256-row tiles fill the v6e/v7x MXU; keep >= 2 grid steps when the batch
    allows so ("parallel",) can shard across v7x's 2 TensorCores. Cap at 128 on
    v4/v5 (128-row MXU). TB stays a multiple of 128 for the lane-dense output."""
    try:
        kind = jax.devices()[0].device_kind.lower()
    except Exception:
        kind = ""
    max_tb = 128 if ("v5" in kind or "v4" in kind) else 256
    if max_tb >= 256 and _round_up(batch, 256) // 256 >= 2:
        return 256
    return 128


def npbiasnet_forward(drug_x, cell_x, np_scores, prep, *, single_buffer_weights=True):
    f32, bf16 = jnp.float32, jnp.bfloat16
    d = prep["dims"]
    dp, npd, cp = d["dp"], d["npd"], d["cp"]
    ep, h0p, h1p = d["ep"], d["h0p"], d["h1p"]

    batch = drug_x.shape[0]
    tb = _pick_batch_tile(batch)
    pb = _round_up(batch, tb)

    # Per-call activation prep only (all weight work was done in prepare_params).
    drug_p = _pad2(drug_x.astype(f32), pb, dp).astype(bf16)
    cell_p = _pad2(cell_x.astype(f32), pb, cp)                 # stays f32 (addend only)
    np_p = _pad2(np_scores.astype(f32), pb, npd).astype(bf16)

    weights = (prep["w_de"], prep["w_att"], prep["w_fc_d"], prep["w_fc_c"],
               prep["w_cls"], prep["w_fc2"], prep["bias"])

    def nbytes(a):
        return a.size * a.dtype.itemsize

    kernel = functools.partial(npbiasnet_kernel, ep=ep, cp=cp, h0p=h0p, h1p=h1p)
    grid = (pb // tb,)

    def run(weight_buffers):
        def const_spec(shape):
            kwargs = {}
            if weight_buffers == 1:
                kwargs["pipeline_mode"] = pl.Buffered(buffer_count=1)
            return pl.BlockSpec(shape, lambda i: (0, 0), **kwargs)

        act_spec = lambda feat: pl.BlockSpec((tb, feat), lambda i: (i, 0))

        # Right-sized VMEM request: resident weights (x buffer count) +
        # double-buffered activation tiles + output rows + compiler headroom.
        weight_bytes = weight_buffers * sum(nbytes(w) for w in weights)
        act_bytes = 2 * tb * (dp * 2 + cp * 4 + npd * 2)
        out_bytes = 2 * tb * 4
        vmem_limit = int(min(max(weight_bytes + act_bytes + out_bytes + (4 << 20),
                                 16 << 20), 64 << 20))

        return pl.pallas_call(
            kernel,
            out_shape=jax.ShapeDtypeStruct((1, pb), f32),
            grid=grid,
            in_specs=[
                act_spec(dp), act_spec(cp), act_spec(npd),
                const_spec((dp, ep)),
                const_spec((npd, cp)),
                const_spec((ep, h0p)),
                const_spec((cp, h0p)),
                const_spec((h0p, h1p)),
                const_spec((1, h1p)),
                const_spec((1, prep["bias"].shape[1])),
            ],
            out_specs=pl.BlockSpec((1, tb), lambda i: (0, i)),
            compiler_params=pltpu.CompilerParams(
                dimension_semantics=("parallel",),
                vmem_limit_bytes=vmem_limit,
            ),
        )(drug_p, cell_p, np_p, *weights)

    if single_buffer_weights:
        try:
            out_row = run(1)
        except Exception:
            # This jax/Mosaic version rejects pl.Buffered(buffer_count=1) for
            # pallas_call inputs; fall back to default double-buffered weights.
            out_row = run(2)
    else:
        out_row = run(2)

    # Lanes [batch, pb) hold bias-driven values from zero-padded batch rows —
    # never consume out_row directly without this slice.
    return out_row.reshape(pb, 1)[:batch]


def init_params(key, drug_in, np_dim, cell_dim, embed_dim, hid0, hid1):
    """Deterministic synthetic parameter init (shapes mirror the nn.Module)."""
    keys = jax.random.split(key, 12)

    def uniform_fan_in(k, shape, fan_in):
        bound = 1.0 / jnp.sqrt(fan_in)
        return jax.random.uniform(k, shape, jnp.float32, -bound, bound)

    def xavier_uniform(k, shape):
        fan_in, fan_out = shape
        bound = jnp.sqrt(6.0 / (fan_in + fan_out))
        return jax.random.uniform(k, shape, jnp.float32, -bound, bound)

    w_fc = uniform_fan_in(keys[4], (embed_dim + cell_dim, hid0), embed_dim + cell_dim)
    return {
        # drug_embed_net: Linear(drug_in, embed_dim) + ReLU
        "w_de": uniform_fan_in(keys[0], (drug_in, embed_dim), drug_in),
        "b_de": uniform_fan_in(keys[1], (1, embed_dim), drug_in),
        # attention_net: Linear(np_dim, cell_dim)
        "w_att": uniform_fan_in(keys[2], (np_dim, cell_dim), np_dim),
        "b_att": uniform_fan_in(keys[3], (1, cell_dim), np_dim),
        # fc: Linear(embed_dim + cell_dim, hid0), stored split along input rows
        "w_fc_d": w_fc[:embed_dim],
        "w_fc_c": w_fc[embed_dim:],
        "b_fc": uniform_fan_in(keys[5], (1, hid0), embed_dim + cell_dim),
        # classifier[0][0]: Linear(hid0, hid1), xavier_uniform weights
        "w_cls": xavier_uniform(keys[6], (hid0, hid1)),
        "b_cls": uniform_fan_in(keys[7], (1, hid1), hid0),
        # classifier[0][1]: BatchNorm1d(hid1), fresh running stats (eval mode)
        "bn_g": jnp.ones((1, hid1), jnp.float32),
        "bn_b": jnp.zeros((1, hid1), jnp.float32),
        "bn_m": jnp.zeros((1, hid1), jnp.float32),
        "bn_v": jnp.ones((1, hid1), jnp.float32),
        # fc2: Linear(hid1, 1)
        "w_fc2": uniform_fan_in(keys[8], (hid1, 1), hid1),
        "b_fc2": uniform_fan_in(keys[9], (1, 1), hid1),
    }


def reference_forward(drug_x, cell_x, np_scores, p, cast=lambda a: a):
    """Pure-JAX reference (eval mode). `cast` optionally rounds matmul operands
    (e.g. to bf16) to mirror the kernel's MXU operand precision. cell_x is kept
    f32 (addend only), matching the kernel."""
    f32 = jnp.float32
    hp = jax.lax.Precision.HIGHEST
    c = lambda a: cast(a).astype(f32)
    drug_e = jnp.maximum(jnp.dot(c(drug_x), c(p["w_de"]), precision=hp) + p["b_de"], 0.0)
    c_w = jnp.dot(c(np_scores), c(p["w_att"]), precision=hp) + p["b_att"]
    cell = c_w + cell_x.astype(f32)
    x = jnp.maximum(jnp.dot(c(drug_e), c(p["w_fc_d"]), precision=hp)
                    + jnp.dot(c(cell), c(p["w_fc_c"]), precision=hp) + p["b_fc"], 0.0)
    y = jnp.dot(c(x), c(p["w_cls"]), precision=hp) + p["b_cls"]
    y = (y - p["bn_m"]) * jax.lax.rsqrt(p["bn_v"] + BN_EPS) * p["bn_g"] + p["bn_b"]
    x = jnp.maximum(y, 0.0)
    return jnp.dot(c(x), c(p["w_fc2"]), precision=hp) + p["b_fc2"]


if __name__ == "__main__":
    # Small shapes consistent with the module's forward:
    #   drug_x [B, drug_in], cell_x [B, cell_dim], np_scores [B, np_dim]
    B, DRUG_IN, NP_DIM, CELL_DIM, EMBED_DIM = 8, 32, 16, 64, 64
    HID0, HID1 = 128, 128   # fc_hid_dim (scaled-down [512, 512])

    key = jax.random.PRNGKey(0)
    k_d, k_c, k_n, k_p = jax.random.split(key, 4)
    drug_x = jax.random.normal(k_d, (B, DRUG_IN), jnp.float32)
    cell_x = jax.random.normal(k_c, (B, CELL_DIM), jnp.float32)
    np_scores = jax.random.normal(k_n, (B, NP_DIM), jnp.float32)

    params = init_params(k_p, DRUG_IN, NP_DIM, CELL_DIM, EMBED_DIM, HID0, HID1)

    # One-time weight prep (BN fold, padding, bf16 cast, bias pack).
    prep = prepare_params(params)
    jax.block_until_ready(prep["w_cls"])

    out = npbiasnet_forward(drug_x, cell_x, np_scores, prep)
    jax.block_until_ready(out)
    assert out.shape == (B, 1)

    # Compare against a reference whose matmul operands are rounded to bf16
    # (same operand precision as the kernel; accumulation in f32).
    to_bf16 = lambda a: a.astype(jnp.bfloat16)
    ref = reference_forward(drug_x, cell_x, np_scores, params, cast=to_bf16)
    assert jnp.allclose(out, ref, atol=3e-2, rtol=3e-2), "mismatch vs reference"
    print("KERNEL_OK")
</pallas_src>

<mosaic_0001>
module attributes {stable_mosaic.version = 11 : i64} {
  func.func @npbiasnet_kernel(%arg0: i32, %arg1: memref<128x128xbf16, #tpu.memory_space<vmem>>, %arg2: memref<128x128xf32, #tpu.memory_space<vmem>>, %arg3: memref<128x128xbf16, #tpu.memory_space<vmem>>, %arg4: memref<128x128xbf16, #tpu.memory_space<vmem>>, %arg5: memref<128x128xbf16, #tpu.memory_space<vmem>>, %arg6: memref<128x128xbf16, #tpu.memory_space<vmem>>, %arg7: memref<128x128xbf16, #tpu.memory_space<vmem>>, %arg8: memref<128x128xbf16, #tpu.memory_space<vmem>>, %arg9: memref<1x128xbf16, #tpu.memory_space<vmem>>, %arg10: memref<1x640xf32, #tpu.memory_space<vmem>>, %arg11: memref<1x128xf32, #tpu.memory_space<vmem>>) attributes {dimension_semantics = [#tpu.dimension_semantics<parallel>], iteration_bounds = array<i64: 1>, scalar_prefetch = 0 : i64, scratch_operands = 0 : i64, tpu.core_type = #tpu.core_type<tc>, window_params = [{transform_indices = @transform_0, window_bounds = array<i64: 128, 128>}, {transform_indices = @transform_1, window_bounds = array<i64: 128, 128>}, {transform_indices = @transform_2, window_bounds = array<i64: 128, 128>}, {pipeline_mode = #tpu.pipeline_mode<synchronous>, transform_indices = @transform_3, window_bounds = array<i64: 128, 128>}, {pipeline_mode = #tpu.pipeline_mode<synchronous>, transform_indices = @transform_4, window_bounds = array<i64: 128, 128>}, {pipeline_mode = #tpu.pipeline_mode<synchronous>, transform_indices = @transform_5, window_bounds = array<i64: 128, 128>}, {pipeline_mode = #tpu.pipeline_mode<synchronous>, transform_indices = @transform_6, window_bounds = array<i64: 128, 128>}, {pipeline_mode = #tpu.pipeline_mode<synchronous>, transform_indices = @transform_7, window_bounds = array<i64: 128, 128>}, {pipeline_mode = #tpu.pipeline_mode<synchronous>, transform_indices = @transform_8, window_bounds = array<i64: 1, 128>}, {pipeline_mode = #tpu.pipeline_mode<synchronous>, transform_indices = @transform_9, window_bounds = array<i64: 1, 640>}, {transform_indices = @transform_10, window_bounds = array<i64: 1, 128>}]} {
    %c0 = arith.constant 0 : index
    %c0_0 = arith.constant 0 : index
    %0 = vector.load %arg10[%c0, %c0_0] : memref<1x640xf32, #tpu.memory_space<vmem>>, vector<1x128xf32>
    %c0_1 = arith.constant 0 : index
    %c128 = arith.constant 128 : index
    %1 = vector.load %arg10[%c0_1, %c128] : memref<1x640xf32, #tpu.memory_space<vmem>>, vector<1x128xf32>
    %c0_2 = arith.constant 0 : index
    %c256 = arith.constant 256 : index
    %2 = vector.load %arg10[%c0_2, %c256] : memref<1x640xf32, #tpu.memory_space<vmem>>, vector<1x128xf32>
    %c0_3 = arith.constant 0 : index
    %c384 = arith.constant 384 : index
    %3 = vector.load %arg10[%c0_3, %c384] : memref<1x640xf32, #tpu.memory_space<vmem>>, vector<1x128xf32>
    %c0_4 = arith.constant 0 : index
    %c512 = arith.constant 512 : index
    %4 = vector.load %arg10[%c0_4, %c512] : memref<1x640xf32, #tpu.memory_space<vmem>>, vector<1x1xf32>
    %c0_5 = arith.constant 0 : index
    %c0_6 = arith.constant 0 : index
    %5 = vector.load %arg1[%c0_5, %c0_6] : memref<128x128xbf16, #tpu.memory_space<vmem>>, vector<128x128xbf16>
    %c0_7 = arith.constant 0 : index
    %c0_8 = arith.constant 0 : index
    %6 = vector.load %arg4[%c0_7, %c0_8] : memref<128x128xbf16, #tpu.memory_space<vmem>>, vector<128x128xbf16>
    %cst = arith.constant dense<0.000000e+00> : vector<128x128xf32>
    %7 = tpu.matmul %5, %6, %cst {dimension_numbers = #tpu.dot_dimension_numbers<[1], [0], [0], [1], [0, 0, 1, 1], [], []>} : vector<128x128xbf16>, vector<128x128xbf16>, vector<128x128xf32> -> vector<128x128xf32>
    %8 = vector.broadcast %0 : vector<1x128xf32> to vector<128x128xf32>
    %9 = arith.addf %7, %8 : vector<128x128xf32>
    %cst_9 = arith.constant 0.000000e+00 : f32
    %10 = vector.broadcast %cst_9 : f32 to vector<128x128xf32>
    %11 = arith.maximumf %9, %10 : vector<128x128xf32>
    %12 = arith.truncf %11 : vector<128x128xf32> to vector<128x128xbf16>
    %c0_10 = arith.constant 0 : index
    %c0_11 = arith.constant 0 : index
    %13 = vector.load %arg3[%c0_10, %c0_11] : memref<128x128xbf16, #tpu.memory_space<vmem>>, vector<128x128xbf16>
    %c0_12 = arith.constant 0 : index
    %c0_13 = arith.constant 0 : index
    %14 = vector.load %arg5[%c0_12, %c0_13] : memref<128x128xbf16, #tpu.memory_space<vmem>>, vector<128x128xbf16>
    %cst_14 = arith.constant dense<0.000000e+00> : vector<128x128xf32>
    %15 = tpu.matmul %13, %14, %cst_14 {dimension_numbers = #tpu.dot_dimension_numbers<[1], [0], [0], [1], [0, 0, 1, 1], [], []>} : vector<128x128xbf16>, vector<128x128xbf16>, vector<128x128xf32> -> vector<128x128xf32>
    %16 = vector.broadcast %1 : vector<1x128xf32> to vector<128x128xf32>
    %17 = arith.addf %15, %16 : vector<128x128xf32>
    %c0_15 = arith.constant 0 : index
    %c0_16 = arith.constant 0 : index
    %18 = vector.load %arg2[%c0_15, %c0_16] : memref<128x128xf32, #tpu.memory_space<vmem>>, vector<128x128xf32>
    %19 = arith.addf %17, %18 : vector<128x128xf32>
    %20 = arith.truncf %19 : vector<128x128xf32> to vector<128x128xbf16>
    %c0_17 = arith.constant 0 : index
    %c0_18 = arith.constant 0 : index
    %21 = vector.load %arg6[%c0_17, %c0_18] : memref<128x128xbf16, #tpu.memory_space<vmem>>, vector<128x128xbf16>
    %cst_19 = arith.constant dense<0.000000e+00> : vector<128x128xf32>
    %22 = tpu.matmul %12, %21, %cst_19 {dimension_numbers = #tpu.dot_dimension_numbers<[1], [0], [0], [1], [0, 0, 1, 1], [], []>} : vector<128x128xbf16>, vector<128x128xbf16>, vector<128x128xf32> -> vector<128x128xf32>
    %c0_20 = arith.constant 0 : index
    %c0_21 = arith.constant 0 : index
    %23 = vector.load %arg7[%c0_20, %c0_21] : memref<128x128xbf16, #tpu.memory_space<vmem>>, vector<128x128xbf16>
    %cst_22 = arith.constant dense<0.000000e+00> : vector<128x128xf32>
    %24 = tpu.matmul %20, %23, %cst_22 {dimension_numbers = #tpu.dot_dimension_numbers<[1], [0], [0], [1], [0, 0, 1, 1], [], []>} : vector<128x128xbf16>, vector<128x128xbf16>, vector<128x128xf32> -> vector<128x128xf32>
    %25 = arith.addf %22, %24 : vector<128x128xf32>
    %26 = vector.broadcast %2 : vector<1x128xf32> to vector<128x128xf32>
    %27 = arith.addf %25, %26 : vector<128x128xf32>
    %cst_23 = arith.constant 0.000000e+00 : f32
    %28 = vector.broadcast %cst_23 : f32 to vector<128x128xf32>
    %29 = arith.maximumf %27, %28 : vector<128x128xf32>
    %30 = arith.truncf %29 : vector<128x128xf32> to vector<128x128xbf16>
    %c0_24 = arith.constant 0 : index
    %c0_25 = arith.constant 0 : index
    %31 = vector.load %arg8[%c0_24, %c0_25] : memref<128x128xbf16, #tpu.memory_space<vmem>>, vector<128x128xbf16>
    %cst_26 = arith.constant dense<0.000000e+00> : vector<128x128xf32>
    %32 = tpu.matmul %30, %31, %cst_26 {dimension_numbers = #tpu.dot_dimension_numbers<[1], [0], [0], [1], [0, 0, 1, 1], [], []>} : vector<128x128xbf16>, vector<128x128xbf16>, vector<128x128xf32> -> vector<128x128xf32>
    %33 = vector.broadcast %3 : vector<1x128xf32> to vector<128x128xf32>
    %34 = arith.addf %32, %33 : vector<128x128xf32>
    %cst_27 = arith.constant 0.000000e+00 : f32
    %35 = vector.broadcast %cst_27 : f32 to vector<128x128xf32>
    %36 = arith.maximumf %34, %35 : vector<128x128xf32>
    %37 = arith.truncf %36 : vector<128x128xf32> to vector<128x128xbf16>
    %c0_28 = arith.constant 0 : index
    %c0_29 = arith.constant 0 : index
    %38 = vector.load %arg9[%c0_28, %c0_29] : memref<1x128xbf16, #tpu.memory_space<vmem>>, vector<1x128xbf16>
    %cst_30 = arith.constant dense<0.000000e+00> : vector<1x128xf32>
    %39 = tpu.matmul %38, %37, %cst_30 {dimension_numbers = #tpu.dot_dimension_numbers<[1], [1], [0], [0], [0, 0, 1, 0], [], []>} : vector<1x128xbf16>, vector<128x128xbf16>, vector<1x128xf32> -> vector<1x128xf32>
    %40 = vector.broadcast %4 : vector<1x1xf32> to vector<1x128xf32>
    %41 = arith.addf %39, %40 : vector<1x128xf32>
    %c0_31 = arith.constant 0 : index
    %c0_32 = arith.constant 0 : index
    %42 = vector.load %arg11[%c0_31, %c0_32] : memref<1x128xf32, #tpu.memory_space<vmem>>, vector<1x128xf32>
    tpu.vector_store %arg11[%c0_31, %c0_32], %41 {strides = array<i32>} : memref<1x128xf32, #tpu.memory_space<vmem>>, vector<1x128xf32>,
    return
  }
  func.func @transform_0(%arg0: i32) -> (i32, i32) {
    %c0_i32 = arith.constant 0 : i32
    %c0_i32_0 = arith.constant 0 : i32
    return %arg0, %c0_i32 : i32, i32
  }
  func.func @transform_1(%arg0: i32) -> (i32, i32) {
    %c0_i32 = arith.constant 0 : i32
    %c0_i32_0 = arith.constant 0 : i32
    return %arg0, %c0_i32 : i32, i32
  }
  func.func @transform_2(%arg0: i32) -> (i32, i32) {
    %c0_i32 = arith.constant 0 : i32
    %c0_i32_0 = arith.constant 0 : i32
    return %arg0, %c0_i32 : i32, i32
  }
  func.func @transform_3(%arg0: i32) -> (i32, i32) {
    %c0_i32 = arith.constant 0 : i32
    %c0_i32_0 = arith.constant 0 : i32
    %c0_i32_1 = arith.constant 0 : i32
    return %c0_i32, %c0_i32_0 : i32, i32
  }
  func.func @transform_4(%arg0: i32) -> (i32, i32) {
    %c0_i32 = arith.constant 0 : i32
    %c0_i32_0 = arith.constant 0 : i32
    %c0_i32_1 = arith.constant 0 : i32
    return %c0_i32, %c0_i32_0 : i32, i32
  }
  func.func @transform_5(%arg0: i32) -> (i32, i32) {
    %c0_i32 = arith.constant 0 : i32
    %c0_i32_0 = arith.constant 0 : i32
    %c0_i32_1 = arith.constant 0 : i32
    return %c0_i32, %c0_i32_0 : i32, i32
  }
  func.func @transform_6(%arg0: i32) -> (i32, i32) {
    %c0_i32 = arith.constant 0 : i32
    %c0_i32_0 = arith.constant 0 : i32
    %c0_i32_1 = arith.constant 0 : i32
    return %c0_i32, %c0_i32_0 : i32, i32
  }
  func.func @transform_7(%arg0: i32) -> (i32, i32) {
    %c0_i32 = arith.constant 0 : i32
    %c0_i32_0 = arith.constant 0 : i32
    %c0_i32_1 = arith.constant 0 : i32
    return %c0_i32, %c0_i32_0 : i32, i32
  }
  func.func @transform_8(%arg0: i32) -> (i32, i32) {
    %c0_i32 = arith.constant 0 : i32
    %c0_i32_0 = arith.constant 0 : i32
    %c0_i32_1 = arith.constant 0 : i32
    return %c0_i32, %c0_i32_0 : i32, i32
  }
  func.func @transform_9(%arg0: i32) -> (i32, i32) {
    %c0_i32 = arith.constant 0 : i32
    %c0_i32_0 = arith.constant 0 : i32
    %c0_i32_1 = arith.constant 0 : i32
    return %c0_i32, %c0_i32_0 : i32, i32
  }
  func.func @transform_10(%arg0: i32) -> (i32, i32) {
    %c0_i32 = arith.constant 0 : i32
    %c0_i32_0 = arith.constant 0 : i32
    return %c0_i32, %arg0 : i32, i32
  }
}

module attributes {stable_mosaic.version = 11 : i64} {
  func.func @npbiasnet_kernel(%arg0: i32, %arg1: memref<128x128xbf16, #tpu.memory_space<vmem>>, %arg2: memref<128x128xf32, #tpu.memory_space<vmem>>, %arg3: memref<128x128xbf16, #tpu.memory_space<vmem>>, %arg4: memref<128x128xbf16, #tpu.memory_space<vmem>>, %arg5: memref<128x128xbf16, #tpu.memory_space<vmem>>, %arg6: memref<128x128xbf16, #tpu.memory_space<vmem>>, %arg7: memref<128x128xbf16, #tpu.memory_space<vmem>>, %arg8: memref<128x128xbf16, #tpu.memory_space<vmem>>, %arg9: memref<1x128xbf16, #tpu.memory_space<vmem>>, %arg10: memref<1x640xf32, #tpu.memory_space<vmem>>, %arg11: memref<1x128xf32, #tpu.memory_space<vmem>>) attributes {dimension_semantics = [#tpu.dimension_semantics<parallel>], iteration_bounds = array<i64: 1>, scalar_prefetch = 0 : i64, scratch_operands = 0 : i64, tpu.core_type = #tpu.core_type<tc>, window_params = [{transform_indices = @transform_0, window_bounds = array<i64: 128, 128>}, {transform_indices = @transform_1, window_bounds = array<i64: 128, 128>}, {transform_indices = @transform_2, window_bounds = array<i64: 128, 128>}, {pipeline_mode = #tpu.pipeline_mode<synchronous>, transform_indices = @transform_3, window_bounds = array<i64: 128, 128>}, {pipeline_mode = #tpu.pipeline_mode<synchronous>, transform_indices = @transform_4, window_bounds = array<i64: 128, 128>}, {pipeline_mode = #tpu.pipeline_mode<synchronous>, transform_indices = @transform_5, window_bounds = array<i64: 128, 128>}, {pipeline_mode = #tpu.pipeline_mode<synchronous>, transform_indices = @transform_6, window_bounds = array<i64: 128, 128>}, {pipeline_mode = #tpu.pipeline_mode<synchronous>, transform_indices = @transform_7, window_bounds = array<i64: 128, 128>}, {pipeline_mode = #tpu.pipeline_mode<synchronous>, transform_indices = @transform_8, window_bounds = array<i64: 1, 128>}, {pipeline_mode = #tpu.pipeline_mode<synchronous>, transform_indices = @transform_9, window_bounds = array<i64: 1, 640>}, {transform_indices = @transform_10, window_bounds = array<i64: 1, 128>}]} {
    %c0 = arith.constant 0 : index
    %c0_0 = arith.constant 0 : index
    %0 = vector.load %arg10[%c0, %c0_0] : memref<1x640xf32, #tpu.memory_space<vmem>>, vector<1x128xf32>
    %c0_1 = arith.constant 0 : index
    %c128 = arith.constant 128 : index
    %1 = vector.load %arg10[%c0_1, %c128] : memref<1x640xf32, #tpu.memory_space<vmem>>, vector<1x128xf32>
    %c0_2 = arith.constant 0 : index
    %c256 = arith.constant 256 : index
    %2 = vector.load %arg10[%c0_2, %c256] : memref<1x640xf32, #tpu.memory_space<vmem>>, vector<1x128xf32>
    %c0_3 = arith.constant 0 : index
    %c384 = arith.constant 384 : index
    %3 = vector.load %arg10[%c0_3, %c384] : memref<1x640xf32, #tpu.memory_space<vmem>>, vector<1x128xf32>
    %c0_4 = arith.constant 0 : index
    %c512 = arith.constant 512 : index
    %4 = vector.load %arg10[%c0_4, %c512] : memref<1x640xf32, #tpu.memory_space<vmem>>, vector<1x1xf32>
    %c0_5 = arith.constant 0 : index
    %c0_6 = arith.constant 0 : index
    %5 = vector.load %arg1[%c0_5, %c0_6] : memref<128x128xbf16, #tpu.memory_space<vmem>>, vector<128x128xbf16>
    %c0_7 = arith.constant 0 : index
    %c0_8 = arith.constant 0 : index
    %6 = vector.load %arg4[%c0_7, %c0_8] : memref<128x128xbf16, #tpu.memory_space<vmem>>, vector<128x128xbf16>
    %cst = arith.constant dense<0.000000e+00> : vector<128x128xf32>
    %7 = tpu.matmul %5, %6, %cst {dimension_numbers = #tpu.dot_dimension_numbers<[1], [0], [0], [1], [0, 0, 1, 1], [], []>} : vector<128x128xbf16>, vector<128x128xbf16>, vector<128x128xf32> -> vector<128x128xf32>
    %8 = vector.broadcast %0 : vector<1x128xf32> to vector<128x128xf32>
    %9 = arith.addf %7, %8 : vector<128x128xf32>
    %cst_9 = arith.constant 0.000000e+00 : f32
    %10 = vector.broadcast %cst_9 : f32 to vector<128x128xf32>
    %11 = arith.maximumf %9, %10 : vector<128x128xf32>
    %12 = arith.truncf %11 : vector<128x128xf32> to vector<128x128xbf16>
    %c0_10 = arith.constant 0 : index
    %c0_11 = arith.constant 0 : index
    %13 = vector.load %arg3[%c0_10, %c0_11] : memref<128x128xbf16, #tpu.memory_space<vmem>>, vector<128x128xbf16>
    %c0_12 = arith.constant 0 : index
    %c0_13 = arith.constant 0 : index
    %14 = vector.load %arg5[%c0_12, %c0_13] : memref<128x128xbf16, #tpu.memory_space<vmem>>, vector<128x128xbf16>
    %cst_14 = arith.constant dense<0.000000e+00> : vector<128x128xf32>
    %15 = tpu.matmul %13, %14, %cst_14 {dimension_numbers = #tpu.dot_dimension_numbers<[1], [0], [0], [1], [0, 0, 1, 1], [], []>} : vector<128x128xbf16>, vector<128x128xbf16>, vector<128x128xf32> -> vector<128x128xf32>
    %16 = vector.broadcast %1 : vector<1x128xf32> to vector<128x128xf32>
    %17 = arith.addf %15, %16 : vector<128x128xf32>
    %c0_15 = arith.constant 0 : index
    %c0_16 = arith.constant 0 : index
    %18 = vector.load %arg2[%c0_15, %c0_16] : memref<128x128xf32, #tpu.memory_space<vmem>>, vector<128x128xf32>
    %19 = arith.addf %17, %18 : vector<128x128xf32>
    %20 = arith.truncf %19 : vector<128x128xf32> to vector<128x128xbf16>
    %c0_17 = arith.constant 0 : index
    %c0_18 = arith.constant 0 : index
    %21 = vector.load %arg6[%c0_17, %c0_18] : memref<128x128xbf16, #tpu.memory_space<vmem>>, vector<128x128xbf16>
    %cst_19 = arith.constant dense<0.000000e+00> : vector<128x128xf32>
    %22 = tpu.matmul %12, %21, %cst_19 {dimension_numbers = #tpu.dot_dimension_numbers<[1], [0], [0], [1], [0, 0, 1, 1], [], []>} : vector<128x128xbf16>, vector<128x128xbf16>, vector<128x128xf32> -> vector<128x128xf32>
    %c0_20 = arith.constant 0 : index
    %c0_21 = arith.constant 0 : index
    %23 = vector.load %arg7[%c0_20, %c0_21] : memref<128x128xbf16, #tpu.memory_space<vmem>>, vector<128x128xbf16>
    %cst_22 = arith.constant dense<0.000000e+00> : vector<128x128xf32>
    %24 = tpu.matmul %20, %23, %cst_22 {dimension_numbers = #tpu.dot_dimension_numbers<[1], [0], [0], [1], [0, 0, 1, 1], [], []>} : vector<128x128xbf16>, vector<128x128xbf16>, vector<128x128xf32> -> vector<128x128xf32>
    %25 = arith.addf %22, %24 : vector<128x128xf32>
    %26 = vector.broadcast %2 : vector<1x128xf32> to vector<128x128xf32>
    %27 = arith.addf %25, %26 : vector<128x128xf32>
    %cst_23 = arith.constant 0.000000e+00 : f32
    %28 = vector.broadcast %cst_23 : f32 to vector<128x128xf32>
    %29 = arith.maximumf %27, %28 : vector<128x128xf32>
    %30 = arith.truncf %29 : vector<128x128xf32> to vector<128x128xbf16>
    %c0_24 = arith.constant 0 : index
    %c0_25 = arith.constant 0 : index
    %31 = vector.load %arg8[%c0_24, %c0_25] : memref<128x128xbf16, #tpu.memory_space<vmem>>, vector<128x128xbf16>
    %cst_26 = arith.constant dense<0.000000e+00> : vector<128x128xf32>
    %32 = tpu.matmul %30, %31, %cst_26 {dimension_numbers = #tpu.dot_dimension_numbers<[1], [0], [0], [1], [0, 0, 1, 1], [], []>} : vector<128x128xbf16>, vector<128x128xbf16>, vector<128x128xf32> -> vector<128x128xf32>
    %33 = vector.broadcast %3 : vector<1x128xf32> to vector<128x128xf32>
    %34 = arith.addf %32, %33 : vector<128x128xf32>
    %cst_27 = arith.constant 0.000000e+00 : f32
    %35 = vector.broadcast %cst_27 : f32 to vector<128x128xf32>
    %36 = arith.maximumf %34, %35 : vector<128x128xf32>
    %37 = arith.truncf %36 : vector<128x128xf32> to vector<128x128xbf16>
    %c0_28 = arith.constant 0 : index
    %c0_29 = arith.constant 0 : index
    %38 = vector.load %arg9[%c0_28, %c0_29] : memref<1x128xbf16, #tpu.memory_space<vmem>>, vector<1x128xbf16>
    %cst_30 = arith.constant dense<0.000000e+00> : vector<1x128xf32>
    %39 = tpu.matmul %38, %37, %cst_30 {dimension_numbers = #tpu.dot_dimension_numbers<[1], [1], [0], [0], [0, 0, 1, 0], [], []>} : vector<1x128xbf16>, vector<128x128xbf16>, vector<1x128xf32> -> vector<1x128xf32>
    %40 = vector.broadcast %4 : vector<1x1xf32> to vector<1x128xf32>
    %41 = arith.addf %39, %40 : vector<1x128xf32>
    %c0_31 = arith.constant 0 : index
    %c0_32 = arith.constant 0 : index
    %42 = vector.load %arg11[%c0_31, %c0_32] : memref<1x128xf32, #tpu.memory_space<vmem>>, vector<1x128xf32>
    tpu.vector_store %arg11[%c0_31, %c0_32], %41 {strides = array<i32>} : memref<1x128xf32, #tpu.memory_space<vmem>>, vector<1x128xf32>,
    return
  }
  func.func @transform_0(%arg0: i32) -> (i32, i32) {
    %c0_i32 = arith.constant 0 : i32
    %c0_i32_0 = arith.constant 0 : i32
    return %arg0, %c0_i32 : i32, i32
  }
  func.func @transform_1(%arg0: i32) -> (i32, i32) {
    %c0_i32 = arith.constant 0 : i32
    %c0_i32_0 = arith.constant 0 : i32
    return %arg0, %c0_i32 : i32, i32
  }
  func.func @transform_2(%arg0: i32) -> (i32, i32) {
    %c0_i32 = arith.constant 0 : i32
    %c0_i32_0 = arith.constant 0 : i32
    return %arg0, %c0_i32 : i32, i32
  }
  func.func @transform_3(%arg0: i32) -> (i32, i32) {
    %c0_i32 = arith.constant 0 : i32
    %c0_i32_0 = arith.constant 0 : i32
    %c0_i32_1 = arith.constant 0 : i32
    return %c0_i32, %c0_i32_0 : i32, i32
  }
  func.func @transform_4(%arg0: i32) -> (i32, i32) {
    %c0_i32 = arith.constant 0 : i32
    %c0_i32_0 = arith.constant 0 : i32
    %c0_i32_1 = arith.constant 0 : i32
    return %c0_i32, %c0_i32_0 : i32, i32
  }
  func.func @transform_5(%arg0: i32) -> (i32, i32) {
    %c0_i32 = arith.constant 0 : i32
    %c0_i32_0 = arith.constant 0 : i32
    %c0_i32_1 = arith.constant 0 : i32
    return %c0_i32, %c0_i32_0 : i32, i32
  }
  func.func @transform_6(%arg0: i32) -> (i32, i32) {
    %c0_i32 = arith.constant 0 : i32
    %c0_i32_0 = arith.constant 0 : i32
    %c0_i32_1 = arith.constant 0 : i32
    return %c0_i32, %c0_i32_0 : i32, i32
  }
  func.func @transform_7(%arg0: i32) -> (i32, i32) {
    %c0_i32 = arith.constant 0 : i32
    %c0_i32_0 = arith.constant 0 : i32
    %c0_i32_1 = arith.constant 0 : i32
    return %c0_i32, %c0_i32_0 : i32, i32
  }
  func.func @transform_8(%arg0: i32) -> (i32, i32) {
    %c0_i32 = arith.constant 0 : i32
    %c0_i32_0 = arith.constant 0 : i32
    %c0_i32_1 = arith.constant 0 : i32
    return %c0_i32, %c0_i32_0 : i32, i32
  }
  func.func @transform_9(%arg0: i32) -> (i32, i32) {
    %c0_i32 = arith.constant 0 : i32
    %c0_i32_0 = arith.constant 0 : i32
    %c0_i32_1 = arith.constant 0 : i32
    return %c0_i32, %c0_i32_0 : i32, i32
  }
  func.func @transform_10(%arg0: i32) -> (i32, i32) {
    %c0_i32 = arith.constant 0 : i32
    %c0_i32_0 = arith.constant 0 : i32
    return %c0_i32, %arg0 : i32, i32
  }
}

</mosaic_0001>

<llo_original>
// kernel: tpu_custom_call.1
$region0: #{tpu_custom_call.1}
  #allocation0 [shape = 'u32[]', space=smem, size = 0x4, offset = 0x4, fixed_abs, tag = 'smem constant byte address 0x4 - core index']
  #allocation1 [shape = 'u32[144,128]{1,0:T(1,128)}', space=vmem, size = 0x12000, scoped, tag = 'internal scratch']
  %s0 = inlined_call_operand.hbm [shape: bf16[128,128], index: 0, kind: input, shape index: {}]
  %s1 = inlined_call_operand.hbm [shape: f32[128,128], index: 1, kind: input, shape index: {}]
  %s2 = inlined_call_operand.hbm [shape: bf16[128,128], index: 2, kind: input, shape index: {}]
  %s3 = inlined_call_operand.hbm [shape: bf16[128,128], index: 3, kind: input, shape index: {}]
  %s4 = inlined_call_operand.hbm [shape: bf16[128,128], index: 4, kind: input, shape index: {}]
  %s5 = inlined_call_operand.hbm [shape: bf16[128,128], index: 5, kind: input, shape index: {}]
  %s6 = inlined_call_operand.hbm [shape: bf16[128,128], index: 6, kind: input, shape index: {}]
  %s7 = inlined_call_operand.hbm [shape: bf16[128,128], index: 7, kind: input, shape index: {}]
  %s8 = inlined_call_operand.vmem [shape: bf16[1,128], index: 8, kind: input, shape index: {}]
  %s9 = inlined_call_operand.vmem [shape: f32[1,640], index: 9, kind: input, shape index: {}]
  %s10 = inlined_call_operand.hbm [shape: f32[1,128], index: 10, kind: output, shape index: {}]
  %s11 = sld [smem:[#allocation0]]
  $region82: #{tpu_custom_call.1} parent=0
    _
  %s13 = ssub.s32 1, %s11
  %s14 = scalar_select 0, %s13, %s11
  $region1: #{tpu_custom_call.1} parent=0
    #allocation2 [shape = 'u8[32768]{0}', space=vmem, size = 0x8000, scoped, tag = 'input window, operand 0, single buffered']
    #allocation3 [shape = 's32[1]{0}', space=sflag, size = 0x4, scoped, tag = 'scoped memory for tpu_custom_call.1']
    #allocation4 [shape = 's32[1]{0}', space=sflag, size = 0x4, scoped, tag = 'scoped memory for tpu_custom_call.1']
    #allocation5 [shape = 'u8[65536]{0}', space=vmem, size = 0x10000, scoped, tag = 'input window, operand 1, single buffered']
    #allocation6 [shape = 's32[1]{0}', space=sflag, size = 0x4, scoped, tag = 'scoped memory for tpu_custom_call.1']
    #allocation7 [shape = 'u8[32768]{0}', space=vmem, size = 0x8000, scoped, tag = 'input window, operand 2, single buffered']
    #allocation8 [shape = 'u8[32768]{0}', space=vmem, size = 0x8000, scoped, tag = 'input window, operand 3, single buffered']
    #allocation9 [shape = 's32[1]{0}', space=sflag, size = 0x4, scoped, tag = 'scoped memory for tpu_custom_call.1']
    #allocation10 [shape = 'u8[32768]{0}', space=vmem, size = 0x8000, scoped, tag = 'input window, operand 4, single buffered']
    #allocation11 [shape = 'u8[32768]{0}', space=vmem, size = 0x8000, scoped, tag = 'input window, operand 5, single buffered']
    #allocation12 [shape = 's32[1]{0}', space=sflag, size = 0x4, scoped, tag = 'scoped memory for tpu_custom_call.1']
    #allocation13 [shape = 'u8[32768]{0}', space=vmem, size = 0x8000, scoped, tag = 'input window, operand 6, single buffered']
    #allocation14 [shape = 'u8[32768]{0}', space=vmem, size = 0x8000, scoped, tag = 'input window, operand 7, single buffered']
    #allocation15 [shape = 's32[1]{0}', space=sflag, size = 0x4, scoped, tag = 'scoped memory for tpu_custom_call.1']
    #allocation16 [shape = 'u8[512]{0}', space=vmem, size = 0x400, scoped, tag = 'output window, operand 0, single buffered']
    %15 = vsyncpa [#allocation3], 0
    %16 = vsyncpa [#allocation6], 0
    %17 = vsyncpa [#allocation9], 0
    %18 = vsyncpa [#allocation12], 0
    %19 = vsyncpa [#allocation15], 0
    %20 = vsyncpa [#allocation4], 0
    // Predicated region
    $region2: #{tpu_custom_call.1} parent=1 // pred_check
      _
    $region3: #{tpu_custom_call.1} parent=1 // pred_check_branch
      %22 = sbr.rel (0) target = $region5
    $region4: #{tpu_custom_call.1} parent=1 // pred_region
      %s24 = ssub.s32 1024, 1024
      %25 = vsyncadd [#allocation3], %s24
      %s26 = sshll.u32 [#allocation2], 4
      %s27 = int_to_ptr.vmem [resolvable:$true] %s26
      %32 = dma.hbm_to_vmem [thread:$0]  %s0, 1024, %s27, [#allocation3], 64, 64, 4
    $region5: #{tpu_custom_call.1} parent=1 // pred_fallthru
      _
    // Predicated region
    $region6: #{tpu_custom_call.1} parent=1 // pred_check
      _
    $region7: #{tpu_custom_call.1} parent=1 // pred_check_branch
      %34 = sbr.rel (0) target = $region9
    $region8: #{tpu_custom_call.1} parent=1 // pred_region
      %s36 = ssub.s32 2048, 2048
      %37 = vsyncadd [#allocation6], %s36
      %s38 = sshll.u32 [#allocation5], 4
      %s39 = int_to_ptr.vmem [resolvable:$true] %s38
      %44 = dma.hbm_to_vmem [thread:$0]  %s1, 2048, %s39, [#allocation6], 128, 128, 8
    $region9: #{tpu_custom_call.1} parent=1 // pred_fallthru
      _
    // Predicated region
    $region10: #{tpu_custom_call.1} parent=1 // pred_check
      _
    $region11: #{tpu_custom_call.1} parent=1 // pred_check_branch
      %46 = sbr.rel (0) target = $region13
    $region12: #{tpu_custom_call.1} parent=1 // pred_region
      %s48 = ssub.s32 1024, 1024
      %49 = vsyncadd [#allocation6], %s48
      %s50 = sshll.u32 [#allocation7], 4
      %s51 = int_to_ptr.vmem [resolvable:$true] %s50
      %56 = dma.hbm_to_vmem [thread:$0]  %s2, 1024, %s51, [#allocation6], 64, 64, 4
    $region13: #{tpu_custom_call.1} parent=1 // pred_fallthru
      _
    // Predicated region
    $region14: #{tpu_custom_call.1} parent=1 // pred_check
      _
    $region15: #{tpu_custom_call.1} parent=1 // pred_check_branch
      %58 = sbr.rel (0) target = $region17
    $region16: #{tpu_custom_call.1} parent=1 // pred_region
      %s60 = ssub.s32 1024, 1024
      %61 = vsyncadd [#allocation9], %s60
      %s62 = sshll.u32 [#allocation8], 4
      %s63 = int_to_ptr.vmem [resolvable:$true] %s62
      %68 = dma.hbm_to_vmem [thread:$0]  %s3, 1024, %s63, [#allocation9], 64, 64, 4
    $region17: #{tpu_custom_call.1} parent=1 // pred_fallthru
      _
    // Predicated region
    $region18: #{tpu_custom_call.1} parent=1 // pred_check
      _
    $region19: #{tpu_custom_call.1} parent=1 // pred_check_branch
      %70 = sbr.rel (0) target = $region21
    $region20: #{tpu_custom_call.1} parent=1 // pred_region
      %s72 = ssub.s32 1024, 1024
      %73 = vsyncadd [#allocation9], %s72
      %s74 = sshll.u32 [#allocation10], 4
      %s75 = int_to_ptr.vmem [resolvable:$true] %s74
      %80 = dma.hbm_to_vmem [thread:$0]  %s4, 1024, %s75, [#allocation9], 64, 64, 4
    $region21: #{tpu_custom_call.1} parent=1 // pred_fallthru
      _
    // Predicated region
    $region22: #{tpu_custom_call.1} parent=1 // pred_check
      _
    $region23: #{tpu_custom_call.1} parent=1 // pred_check_branch
      %82 = sbr.rel (0) target = $region25
    $region24: #{tpu_custom_call.1} parent=1 // pred_region
      %s84 = ssub.s32 1024, 1024
      %85 = vsyncadd [#allocation12], %s84
      %s86 = sshll.u32 [#allocation11], 4
      %s87 = int_to_ptr.vmem [resolvable:$true] %s86
      %92 = dma.hbm_to_vmem [thread:$0]  %s5, 1024, %s87, [#allocation12], 64, 64, 4
    $region25: #{tpu_custom_call.1} parent=1 // pred_fallthru
      _
    // Predicated region
    $region26: #{tpu_custom_call.1} parent=1 // pred_check
      _
    $region27: #{tpu_custom_call.1} parent=1 // pred_check_branch
      %94 = sbr.rel (0) target = $region29
    $region28: #{tpu_custom_call.1} parent=1 // pred_region
      %s96 = ssub.s32 1024, 1024
      %97 = vsyncadd [#allocation12], %s96
      %s98 = sshll.u32 [#allocation13], 4
      %s99 = int_to_ptr.vmem [resolvable:$true] %s98
      %104 = dma.hbm_to_vmem [thread:$0]  %s6, 1024, %s99, [#allocation12], 64, 64, 4
    $region29: #{tpu_custom_call.1} parent=1 // pred_fallthru
      _
    // Predicated region
    $region30: #{tpu_custom_call.1} parent=1 // pred_check
      _
    $region31: #{tpu_custom_call.1} parent=1 // pred_check_branch
      %106 = sbr.rel (0) target = $region33
    $region32: #{tpu_custom_call.1} parent=1 // pred_region
      %s108 = ssub.s32 1024, 1024
      %109 = vsyncadd [#allocation15], %s108
      %s110 = sshll.u32 [#allocation14], 4
      %s111 = int_to_ptr.vmem [resolvable:$true] %s110
      %116 = dma.hbm_to_vmem [thread:$0]  %s7, 1024, %s111, [#allocation15], 64, 64, 4
    $region33: #{tpu_custom_call.1} parent=1 // pred_fallthru
      _
    // Predicated region
    $region34: #{tpu_custom_call.1} parent=1 // pred_check
      _
    $region35: #{tpu_custom_call.1} parent=1 // pred_check_branch
      %118 = sbr.rel (0) target = $region37
    $region36: #{tpu_custom_call.1} parent=1 // pred_region
      _
    $region37: #{tpu_custom_call.1} parent=1 // pred_fallthru
      _
    // Predicated region
    $region38: #{tpu_custom_call.1} parent=1 // pred_check
      _
    $region39: #{tpu_custom_call.1} parent=1 // pred_check_branch
      %120 = sbr.rel (0) target = $region41
    $region40: #{tpu_custom_call.1} parent=1 // pred_region
      _
    $region41: #{tpu_custom_call.1} parent=1 // pred_fallthru
      _
    // Predicated region
    $region42: #{tpu_custom_call.1} parent=1 // pred_check
      _
    $region43: #{tpu_custom_call.1} parent=1 // pred_check_branch
      %122 = sbr.rel (0) target = $region45
    $region44: #{tpu_custom_call.1} parent=1 // pred_region
      %123 = dma.done [#allocation3], 1024
    $region45: #{tpu_custom_call.1} parent=1 // pred_fallthru
      _
    // Predicated region
    $region46: #{tpu_custom_call.1} parent=1 // pred_check
      _
    $region47: #{tpu_custom_call.1} parent=1 // pred_check_branch
      %125 = sbr.rel (0) target = $region49
    $region48: #{tpu_custom_call.1} parent=1 // pred_region
      %126 = dma.done [#allocation6], 2048
    $region49: #{tpu_custom_call.1} parent=1 // pred_fallthru
      _
    // Predicated region
    $region50: #{tpu_custom_call.1} parent=1 // pred_check
      _
    $region51: #{tpu_custom_call.1} parent=1 // pred_check_branch
      %128 = sbr.rel (0) target = $region53
    $region52: #{tpu_custom_call.1} parent=1 // pred_region
      %129 = dma.done [#allocation6], 1024
    $region53: #{tpu_custom_call.1} parent=1 // pred_fallthru
      _
    // Predicated region
    $region54: #{tpu_custom_call.1} parent=1 // pred_check
      _
    $region55: #{tpu_custom_call.1} parent=1 // pred_check_branch
      %131 = sbr.rel (0) target = $region57
    $region56: #{tpu_custom_call.1} parent=1 // pred_region
      %132 = dma.done [#allocation9], 1024
    $region57: #{tpu_custom_call.1} parent=1 // pred_fallthru
      _
    // Predicated region
    $region58: #{tpu_custom_call.1} parent=1 // pred_check
      _
    $region59: #{tpu_custom_call.1} parent=1 // pred_check_branch
      %134 = sbr.rel (0) target = $region61
    $region60: #{tpu_custom_call.1} parent=1 // pred_region
      %135 = dma.done [#allocation9], 1024
    $region61: #{tpu_custom_call.1} parent=1 // pred_fallthru
      _
    // Predicated region
    $region62: #{tpu_custom_call.1} parent=1 // pred_check
      _
    $region63: #{tpu_custom_call.1} parent=1 // pred_check_branch
      %137 = sbr.rel (0) target = $region65
    $region64: #{tpu_custom_call.1} parent=1 // pred_region
      %138 = dma.done [#allocation12], 1024
    $region65: #{tpu_custom_call.1} parent=1 // pred_fallthru
      _
    // Predicated region
    $region66: #{tpu_custom_call.1} parent=1 // pred_check
      _
    $region67: #{tpu_custom_call.1} parent=1 // pred_check_branch
      %140 = sbr.rel (0) target = $region69
    $region68: #{tpu_custom_call.1} parent=1 // pred_region
      %141 = dma.done [#allocation12], 1024
    $region69: #{tpu_custom_call.1} parent=1 // pred_fallthru
      _
    // Predicated region
    $region70: #{tpu_custom_call.1} parent=1 // pred_check
      _
    $region71: #{tpu_custom_call.1} parent=1 // pred_check_branch
      %143 = sbr.rel (0) target = $region73
    $region72: #{tpu_custom_call.1} parent=1 // pred_region
      %144 = dma.done [#allocation15], 1024
    $region73: #{tpu_custom_call.1} parent=1 // pred_fallthru
      _
    %v146 = vld [vmem:[%s9] sm:$0x1]
    %v147 = vld [vmem:[%s9 + $0x1] sm:$0x1]
    %v148 = vld [vmem:[%s9 + $0x2] sm:$0x1]
    %v149 = vld [vmem:[%s9 + $0x3] sm:$0x1]
    %v150 = vld [vmem:[%s9 + $0x4] sm:$0x1]
    %v151 = vld [vmem:[#allocation2] sm:$0xf]
    %v152 = vld [vmem:[#allocation2 + $0x4] sm:$0xf]
    %v153 = vld [vmem:[#allocation2 + $0x8] sm:$0xf]
    %v154 = vld [vmem:[#allocation2 + $0xc] sm:$0xf]
    %v155 = vld [vmem:[#allocation2 + $0x10] sm:$0xf]
    %v156 = vld [vmem:[#allocation2 + $0x14] sm:$0xf]
    %v157 = vld [vmem:[#allocation2 + $0x18] sm:$0xf]
    %v158 = vld [vmem:[#allocation2 + $0x1c] sm:$0xf]
    %v159 = vld [vmem:[#allocation2 + $0x20] sm:$0xf]
    %v160 = vld [vmem:[#allocation2 + $0x24] sm:$0xf]
    %v161 = vld [vmem:[#allocation2 + $0x28] sm:$0xf]
    %v162 = vld [vmem:[#allocation2 + $0x2c] sm:$0xf]
    %v163 = vld [vmem:[#allocation2 + $0x30] sm:$0xf]
    %v164 = vld [vmem:[#allocation2 + $0x34] sm:$0xf]
    %v165 = vld [vmem:[#allocation2 + $0x38] sm:$0xf]
    %v166 = vld [vmem:[#allocation2 + $0x3c] sm:$0xf]
    %v167 = vld [vmem:[#allocation8] sm:$0xf]
    %v168 = vld [vmem:[#allocation8 + $0x4] sm:$0xf]
    %v169 = vld [vmem:[#allocation8 + $0x8] sm:$0xf]
    %v170 = vld [vmem:[#allocation8 + $0xc] sm:$0xf]
    %v171 = vld [vmem:[#allocation8 + $0x10] sm:$0xf]
    %v172 = vld [vmem:[#allocation8 + $0x14] sm:$0xf]
    %v173 = vld [vmem:[#allocation8 + $0x18] sm:$0xf]
    %v174 = vld [vmem:[#allocation8 + $0x1c] sm:$0xf]
    %v175 = vld [vmem:[#allocation8 + $0x20] sm:$0xf]
    %v176 = vld [vmem:[#allocation8 + $0x24] sm:$0xf]
    %v177 = vld [vmem:[#allocation8 + $0x28] sm:$0xf]
    %v178 = vld [vmem:[#allocation8 + $0x2c] sm:$0xf]
    %v179 = vld [vmem:[#allocation8 + $0x30] sm:$0xf]
    %v180 = vld [vmem:[#allocation8 + $0x34] sm:$0xf]
    %v181 = vld [vmem:[#allocation8 + $0x38] sm:$0xf]
    %v182 = vld [vmem:[#allocation8 + $0x3c] sm:$0xf]
    %v184 = vlaneseq
    %v185 = vshrl.u32 %v184, 7
    %v186 = vsub.s32 0, %v185
    %v187 = vrot.slane %v146, %v186
    %v205 = vunpack.c.l.b16 %v151
    %v206 = vunpack.c.l.b16 %v152
    %v207 = vunpack.c.l.b16 %v153
    %v208 = vunpack.c.l.b16 %v154
    %v209 = vunpack.c.l.b16 %v155
    %v210 = vunpack.c.l.b16 %v156
    %v211 = vunpack.c.l.b16 %v157
    %v212 = vunpack.c.l.b16 %v158
    %v213 = vunpack.c.l.b16 %v159
    %v214 = vunpack.c.l.b16 %v160
    %v215 = vunpack.c.l.b16 %v161
    %v216 = vunpack.c.l.b16 %v162
    %v217 = vunpack.c.l.b16 %v163
    %v218 = vunpack.c.l.b16 %v164
    %v219 = vunpack.c.l.b16 %v165
    %v220 = vunpack.c.l.b16 %v166
    %v221 = vpack.c.b16 %v206, %v205
    %v222 = vpack.c.b16 %v208, %v207
    %v223 = vpack.c.b16 %v210, %v209
    %v224 = vpack.c.b16 %v212, %v211
    %v225 = vpack.c.b16 %v214, %v213
    %v226 = vpack.c.b16 %v216, %v215
    %v227 = vpack.c.b16 %v218, %v217
    %v228 = vpack.c.b16 %v220, %v219
    %v253 = vunpack.c.l.b16 %v167
    %v254 = vunpack.c.l.b16 %v168
    %v255 = vunpack.c.l.b16 %v169
    %v256 = vunpack.c.l.b16 %v170
    %v257 = vunpack.c.l.b16 %v171
    %v258 = vunpack.c.l.b16 %v172
    %v259 = vunpack.c.l.b16 %v173
    %v260 = vunpack.c.l.b16 %v174
    %v261 = vunpack.c.l.b16 %v175
    %v262 = vunpack.c.l.b16 %v176
    %v263 = vunpack.c.l.b16 %v177
    %v264 = vunpack.c.l.b16 %v178
    %v265 = vunpack.c.l.b16 %v179
    %v266 = vunpack.c.l.b16 %v180
    %v267 = vunpack.c.l.b16 %v181
    %v268 = vunpack.c.l.b16 %v182
    %v269 = vpack.c.b16 %v254, %v253
    %v270 = vpack.c.b16 %v256, %v255
    %v271 = vpack.c.b16 %v258, %v257
    %v272 = vpack.c.b16 %v260, %v259
    %v273 = vpack.c.b16 %v262, %v261
    %v274 = vpack.c.b16 %v264, %v263
    %v275 = vpack.c.b16 %v266, %v265
    %v276 = vpack.c.b16 %v268, %v267
    %285 = vmatprep.subr.bf16.mxu0 0
    %286 = vmatpush1.bf16.msra.mxu0 %v269
    %287 = vmatprep.subr.bf16.mxu0 0
    %288 = vmatpush1.bf16.msra.mxu0 %v270
    %289 = vmatprep.subr.bf16.mxu0 0
    %290 = vmatpush1.bf16.msra.mxu0 %v271
    %291 = vmatprep.subr.bf16.mxu0 0
    %292 = vmatpush1.bf16.msra.mxu0 %v272
    %293 = vmatprep.subr.bf16.mxu0 0
    %294 = vmatpush1.bf16.msra.mxu0 %v273
    %295 = vmatprep.subr.bf16.mxu0 0
    %296 = vmatpush1.bf16.msra.mxu0 %v274
    %297 = vmatprep.subr.bf16.mxu0 0
    %298 = vmatpush1.bf16.msra.mxu0 %v275
    %299 = vmatprep.subr.bf16.mxu0 0
    %300 = vmatpush1.bf16.msra.mxu0 %v276
    %301 = vmatprep.subr.bf16.mxu0 0
    %302 = vmatpush1.bf16.msra.mxu0 0
    %303 = vmatprep.subr.bf16.mxu0 0
    %304 = vmatpush1.bf16.msra.mxu0 0
    %305 = vmatprep.subr.bf16.mxu0 0
    %306 = vmatpush1.bf16.msra.mxu0 0
    %307 = vmatprep.subr.bf16.mxu0 0
    %308 = vmatpush1.bf16.msra.mxu0 0
    %309 = vmatprep.subr.bf16.mxu0 0
    %310 = vmatpush1.bf16.msra.mxu0 0
    %311 = vmatprep.subr.bf16.mxu0 0
    %312 = vmatpush1.bf16.msra.mxu0 0
    %313 = vmatprep.subr.bf16.mxu0 0
    %314 = vmatpush1.bf16.msra.mxu0 0
    %315 = vmatprep.subr.bf16.mxu0 0
    %316 = vmatpush1.bf16.msra.mxu0 0
    %317 = vmatprep.mubr.bf16.mxu0 0
    %318 = vmatmul.mubr.bf16.gmra.mrb[0].mxu0 %v221
    %v319 = vpop.f32.mrb[0].mxu0
    %v320 = vadd.f32 %v187, %v319
    %v321 = vpop.f32.mrb[0].mxu0
    %v322 = vpop.f32.mrb[0].mxu0
    %v323 = vadd.f32 %v187, %v322
    %v324 = vpop.f32.mrb[0].mxu0
    %325 = vmatprep.mubr.bf16.mxu0 0
    %326 = vmatmul.mubr.bf16.gmra.mrb[0].mxu0 %v222
    %v327 = vpop.f32.mrb[0].mxu0
    %v328 = vadd.f32 %v187, %v327
    %v329 = vpop.f32.mrb[0].mxu0
    %v330 = vpop.f32.mrb[0].mxu0
    %v331 = vadd.f32 %v187, %v330
    %v332 = vpop.f32.mrb[0].mxu0
    %333 = vmatprep.mubr.bf16.mxu0 0
    %334 = vmatmul.mubr.bf16.gmra.mrb[0].mxu0 %v223
    %v335 = vpop.f32.mrb[0].mxu0
    %v336 = vadd.f32 %v187, %v335
    %v337 = vpop.f32.mrb[0].mxu0
    %v338 = vpop.f32.mrb[0].mxu0
    %v339 = vadd.f32 %v187, %v338
    %v340 = vpop.f32.mrb[0].mxu0
    %341 = vmatprep.mubr.bf16.mxu0 0
    %342 = vmatmul.mubr.bf16.gmra.mrb[0].mxu0 %v224
    %v343 = vpop.f32.mrb[0].mxu0
    %v344 = vadd.f32 %v187, %v343
    %v345 = vpop.f32.mrb[0].mxu0
    %v346 = vpop.f32.mrb[0].mxu0
    %v347 = vadd.f32 %v187, %v346
    %v348 = vpop.f32.mrb[0].mxu0
    %349 = vmatprep.mubr.bf16.mxu0 0
    %350 = vmatmul.mubr.bf16.gmra.mrb[0].mxu0 %v225
    %v351 = vpop.f32.mrb[0].mxu0
    %v352 = vadd.f32 %v187, %v351
    %v353 = vpop.f32.mrb[0].mxu0
    %v354 = vpop.f32.mrb[0].mxu0
    %v355 = vadd.f32 %v187, %v354
    %v356 = vpop.f32.mrb[0].mxu0
    %357 = vmatprep.mubr.bf16.mxu0 0
    %358 = vmatmul.mubr.bf16.gmra.mrb[0].mxu0 %v226
    %v359 = vpop.f32.mrb[0].mxu0
    %v360 = vadd.f32 %v187, %v359
    %v361 = vpop.f32.mrb[0].mxu0
    %v362 = vpop.f32.mrb[0].mxu0
    %v363 = vadd.f32 %v187, %v362
    %v364 = vpop.f32.mrb[0].mxu0
    %365 = vmatprep.mubr.bf16.mxu0 0
    %366 = vmatmul.mubr.bf16.gmra.mrb[0].mxu0 %v227
    %v367 = vpop.f32.mrb[0].mxu0
    %v368 = vadd.f32 %v187, %v367
    %v369 = vpop.f32.mrb[0].mxu0
    %v370 = vpop.f32.mrb[0].mxu0
    %v371 = vadd.f32 %v187, %v370
    %v372 = vpop.f32.mrb[0].mxu0
    %373 = vmatprep.mubr.bf16.mxu0 0
    %374 = vmatmul.mubr.bf16.gmra.mrb[0].mxu0 %v228
    %v375 = vpop.f32.mrb[0].mxu0
    %v376 = vadd.f32 %v187, %v375
    %v377 = vpop.f32.mrb[0].mxu0
    %v378 = vpop.f32.mrb[0].mxu0
    %v379 = vadd.f32 %v187, %v378
    %v380 = vpop.f32.mrb[0].mxu0
    %381 = vdwg.mxu0
    %v382 = vmax.f32 %v320, 0.0
    %v383 = vmax.f32 %v323, 0.0
    %v384 = vmax.f32 %v328, 0.0
    %v385 = vmax.f32 %v331, 0.0
    %v386 = vmax.f32 %v336, 0.0
    %v387 = vmax.f32 %v339, 0.0
    %v388 = vmax.f32 %v344, 0.0
    %v389 = vmax.f32 %v347, 0.0
    %v390 = vmax.f32 %v352, 0.0
    %v391 = vmax.f32 %v355, 0.0
    %v392 = vmax.f32 %v360, 0.0
    %v393 = vmax.f32 %v363, 0.0
    %v394 = vmax.f32 %v368, 0.0
    %v395 = vmax.f32 %v371, 0.0
    %v396 = vmax.f32 %v376, 0.0
    %v397 = vmax.f32 %v379, 0.0
    %v398 = vpack.c.bf16 %v383, %v382
    %v399 = vpack.c.bf16 %v385, %v384
    %v400 = vpack.c.bf16 %v387, %v386
    %v401 = vpack.c.bf16 %v389, %v388
    %v402 = vpack.c.bf16 %v391, %v390
    %v403 = vpack.c.bf16 %v393, %v392
    %v404 = vpack.c.bf16 %v395, %v394
    %v405 = vpack.c.bf16 %v397, %v396
    %v406 = vld [vmem:[#allocation7] sm:$0xf]
    %v407 = vld [vmem:[#allocation7 + $0x4] sm:$0xf]
    %v408 = vld [vmem:[#allocation7 + $0x8] sm:$0xf]
    %v409 = vld [vmem:[#allocation7 + $0xc] sm:$0xf]
    %v410 = vld [vmem:[#allocation7 + $0x10] sm:$0xf]
    %v411 = vld [vmem:[#allocation7 + $0x14] sm:$0xf]
    %v412 = vld [vmem:[#allocation7 + $0x18] sm:$0xf]
    %v413 = vld [vmem:[#allocation7 + $0x1c] sm:$0xf]
    %v414 = vld [vmem:[#allocation7 + $0x20] sm:$0xf]
    %v415 = vld [vmem:[#allocation7 + $0x24] sm:$0xf]
    %v416 = vld [vmem:[#allocation7 + $0x28] sm:$0xf]
    %v417 = vld [vmem:[#allocation7 + $0x2c] sm:$0xf]
    %v418 = vld [vmem:[#allocation7 + $0x30] sm:$0xf]
    %v419 = vld [vmem:[#allocation7 + $0x34] sm:$0xf]
    %v420 = vld [vmem:[#allocation7 + $0x38] sm:$0xf]
    %v421 = vld [vmem:[#allocation7 + $0x3c] sm:$0xf]
    %v422 = vld [vmem:[#allocation10] sm:$0xf]
    %v423 = vld [vmem:[#allocation10 + $0x4] sm:$0xf]
    %v424 = vld [vmem:[#allocation10 + $0x8] sm:$0xf]
    %v425 = vld [vmem:[#allocation10 + $0xc] sm:$0xf]
    %v426 = vld [vmem:[#allocation10 + $0x10] sm:$0xf]
    %v427 = vld [vmem:[#allocation10 + $0x14] sm:$0xf]
    %v428 = vld [vmem:[#allocation10 + $0x18] sm:$0xf]
    %v429 = vld [vmem:[#allocation10 + $0x1c] sm:$0xf]
    %v430 = vld [vmem:[#allocation10 + $0x20] sm:$0xf]
    %v431 = vld [vmem:[#allocation10 + $0x24] sm:$0xf]
    %v432 = vld [vmem:[#allocation10 + $0x28] sm:$0xf]
    %v433 = vld [vmem:[#allocation10 + $0x2c] sm:$0xf]
    %v434 = vld [vmem:[#allocation10 + $0x30] sm:$0xf]
    %v435 = vld [vmem:[#allocation10 + $0x34] sm:$0xf]
    %v436 = vld [vmem:[#allocation10 + $0x38] sm:$0xf]
    %v437 = vld [vmem:[#allocation10 + $0x3c] sm:$0xf]
    %v439 = vlaneseq
    %v440 = vshrl.u32 %v439, 7
    %v441 = vsub.s32 0, %v440
    %v442 = vrot.slane %v147, %v441
    %v460 = vunpack.c.l.b16 %v406
    %v461 = vunpack.c.l.b16 %v407
    %v462 = vunpack.c.l.b16 %v408
    %v463 = vunpack.c.l.b16 %v409
    %v464 = vunpack.c.l.b16 %v410
    %v465 = vunpack.c.l.b16 %v411
    %v466 = vunpack.c.l.b16 %v412
    %v467 = vunpack.c.l.b16 %v413
    %v468 = vunpack.c.l.b16 %v414
    %v469 = vunpack.c.l.b16 %v415
    %v470 = vunpack.c.l.b16 %v416
    %v471 = vunpack.c.l.b16 %v417
    %v472 = vunpack.c.l.b16 %v418
    %v473 = vunpack.c.l.b16 %v419
    %v474 = vunpack.c.l.b16 %v420
    %v475 = vunpack.c.l.b16 %v421
    %v476 = vpack.c.b16 %v461, %v460
    %v477 = vpack.c.b16 %v463, %v462
    %v478 = vpack.c.b16 %v465, %v464
    %v479 = vpack.c.b16 %v467, %v466
    %v480 = vpack.c.b16 %v469, %v468
    %v481 = vpack.c.b16 %v471, %v470
    %v482 = vpack.c.b16 %v473, %v472
    %v483 = vpack.c.b16 %v475, %v474
    %v508 = vunpack.c.l.b16 %v422
    %v509 = vunpack.c.l.b16 %v423
    %v510 = vunpack.c.l.b16 %v424
    %v511 = vunpack.c.l.b16 %v425
    %v512 = vunpack.c.l.b16 %v426
    %v513 = vunpack.c.l.b16 %v427
    %v514 = vunpack.c.l.b16 %v428
    %v515 = vunpack.c.l.b16 %v429
    %v516 = vunpack.c.l.b16 %v430
    %v517 = vunpack.c.l.b16 %v431
    %v518 = vunpack.c.l.b16 %v432
    %v519 = vunpack.c.l.b16 %v433
    %v520 = vunpack.c.l.b16 %v434
    %v521 = vunpack.c.l.b16 %v435
    %v522 = vunpack.c.l.b16 %v436
    %v523 = vunpack.c.l.b16 %v437
    %v524 = vpack.c.b16 %v509, %v508
    %v525 = vpack.c.b16 %v511, %v510
    %v526 = vpack.c.b16 %v513, %v512
    %v527 = vpack.c.b16 %v515, %v514
    %v528 = vpack.c.b16 %v517, %v516
    %v529 = vpack.c.b16 %v519, %v518
    %v530 = vpack.c.b16 %v521, %v520
    %v531 = vpack.c.b16 %v523, %v522
    %540 = vmatprep.subr.bf16.mxu0 0
    %541 = vmatpush1.bf16.msra.mxu0 %v524
    %542 = vmatprep.subr.bf16.mxu0 0
    %543 = vmatpush1.bf16.msra.mxu0 %v525
    %544 = vmatprep.subr.bf16.mxu0 0
    %545 = vmatpush1.bf16.msra.mxu0 %v526
    %546 = vmatprep.subr.bf16.mxu0 0
    %547 = vmatpush1.bf16.msra.mxu0 %v527
    %548 = vmatprep.subr.bf16.mxu0 0
    %549 = vmatpush1.bf16.msra.mxu0 %v528
    %550 = vmatprep.subr.bf16.mxu0 0
    %551 = vmatpush1.bf16.msra.mxu0 %v529
    %552 = vmatprep.subr.bf16.mxu0 0
    %553 = vmatpush1.bf16.msra.mxu0 %v530
    %554 = vmatprep.subr.bf16.mxu0 0
    %555 = vmatpush1.bf16.msra.mxu0 %v531
    %556 = vmatprep.subr.bf16.mxu0 0
    %557 = vmatpush1.bf16.msra.mxu0 0
    %558 = vmatprep.subr.bf16.mxu0 0
    %559 = vmatpush1.bf16.msra.mxu0 0
    %560 = vmatprep.subr.bf16.mxu0 0
    %561 = vmatpush1.bf16.msra.mxu0 0
    %562 = vmatprep.subr.bf16.mxu0 0
    %563 = vmatpush1.bf16.msra.mxu0 0
    %564 = vmatprep.subr.bf16.mxu0 0
    %565 = vmatpush1.bf16.msra.mxu0 0
    %566 = vmatprep.subr.bf16.mxu0 0
    %567 = vmatpush1.bf16.msra.mxu0 0
    %568 = vmatprep.subr.bf16.mxu0 0
    %569 = vmatpush1.bf16.msra.mxu0 0
    %570 = vmatprep.subr.bf16.mxu0 0
    %571 = vmatpush1.bf16.msra.mxu0 0
    %572 = vmatprep.mubr.bf16.mxu0 0
    %573 = vmatmul.mubr.bf16.gmra.mrb[0].mxu0 %v476
    %v574 = vpop.f32.mrb[0].mxu0
    %v575 = vadd.f32 %v442, %v574
    %v576 = vpop.f32.mrb[0].mxu0
    %v577 = vpop.f32.mrb[0].mxu0
    %v578 = vadd.f32 %v442, %v577
    %v579 = vpop.f32.mrb[0].mxu0
    %580 = vmatprep.mubr.bf16.mxu0 0
    %581 = vmatmul.mubr.bf16.gmra.mrb[0].mxu0 %v477
    %v582 = vpop.f32.mrb[0].mxu0
    %v583 = vadd.f32 %v442, %v582
    %v584 = vpop.f32.mrb[0].mxu0
    %v585 = vpop.f32.mrb[0].mxu0
    %v586 = vadd.f32 %v442, %v585
    %v587 = vpop.f32.mrb[0].mxu0
    %588 = vmatprep.mubr.bf16.mxu0 0
    %589 = vmatmul.mubr.bf16.gmra.mrb[0].mxu0 %v478
    %v590 = vpop.f32.mrb[0].mxu0
    %v591 = vadd.f32 %v442, %v590
    %v592 = vpop.f32.mrb[0].mxu0
    %v593 = vpop.f32.mrb[0].mxu0
    %v594 = vadd.f32 %v442, %v593
    %v595 = vpop.f32.mrb[0].mxu0
    %596 = vmatprep.mubr.bf16.mxu0 0
    %597 = vmatmul.mubr.bf16.gmra.mrb[0].mxu0 %v479
    %v598 = vpop.f32.mrb[0].mxu0
    %v599 = vadd.f32 %v442, %v598
    %v600 = vpop.f32.mrb[0].mxu0
    %v601 = vpop.f32.mrb[0].mxu0
    %v602 = vadd.f32 %v442, %v601
    %v603 = vpop.f32.mrb[0].mxu0
    %604 = vmatprep.mubr.bf16.mxu0 0
    %605 = vmatmul.mubr.bf16.gmra.mrb[0].mxu0 %v480
    %v606 = vpop.f32.mrb[0].mxu0
    %v607 = vadd.f32 %v442, %v606
    %v608 = vpop.f32.mrb[0].mxu0
    %v609 = vpop.f32.mrb[0].mxu0
    %v610 = vadd.f32 %v442, %v609
    %v611 = vpop.f32.mrb[0].mxu0
    %612 = vmatprep.mubr.bf16.mxu0 0
    %613 = vmatmul.mubr.bf16.gmra.mrb[0].mxu0 %v481
    %v614 = vpop.f32.mrb[0].mxu0
    %v615 = vadd.f32 %v442, %v614
    %v616 = vpop.f32.mrb[0].mxu0
    %v617 = vpop.f32.mrb[0].mxu0
    %v618 = vadd.f32 %v442, %v617
    %v619 = vpop.f32.mrb[0].mxu0
    %620 = vmatprep.mubr.bf16.mxu0 0
    %621 = vmatmul.mubr.bf16.gmra.mrb[0].mxu0 %v482
    %v622 = vpop.f32.mrb[0].mxu0
    %v623 = vadd.f32 %v442, %v622
    %v624 = vpop.f32.mrb[0].mxu0
    %v625 = vpop.f32.mrb[0].mxu0
    %v626 = vadd.f32 %v442, %v625
    %v627 = vpop.f32.mrb[0].mxu0
    %628 = vmatprep.mubr.bf16.mxu0 0
    %629 = vmatmul.mubr.bf16.gmra.mrb[0].mxu0 %v483
    %v630 = vpop.f32.mrb[0].mxu0
    %v631 = vadd.f32 %v442, %v630
    %v632 = vpop.f32.mrb[0].mxu0
    %v633 = vpop.f32.mrb[0].mxu0
    %v634 = vadd.f32 %v442, %v633
    %v635 = vpop.f32.mrb[0].mxu0
    %636 = vdwg.mxu0
    %v637 = vld [vmem:[#allocation5] sm:$0xff]
    %v638 = vld [vmem:[#allocation5 + $0x8] sm:$0xff]
    %v639 = vld [vmem:[#allocation5 + $0x10] sm:$0xff]
    %v640 = vld [vmem:[#allocation5 + $0x18] sm:$0xff]
    %v641 = vld [vmem:[#allocation5 + $0x20] sm:$0xff]
    %v642 = vld [vmem:[#allocation5 + $0x28] sm:$0xff]
    %v643 = vld [vmem:[#allocation5 + $0x30] sm:$0xff]
    %v644 = vld [vmem:[#allocation5 + $0x38] sm:$0xff]
    %v645 = vld [vmem:[#allocation5 + $0x40] sm:$0xff]
    %v646 = vld [vmem:[#allocation5 + $0x48] sm:$0xff]
    %v647 = vld [vmem:[#allocation5 + $0x50] sm:$0xff]
    %v648 = vld [vmem:[#allocation5 + $0x58] sm:$0xff]
    %v649 = vld [vmem:[#allocation5 + $0x60] sm:$0xff]
    %v650 = vld [vmem:[#allocation5 + $0x68] sm:$0xff]
    %v651 = vld [vmem:[#allocation5 + $0x70] sm:$0xff]
    %v652 = vld [vmem:[#allocation5 + $0x78] sm:$0xff]
    %v653 = vadd.f32 %v575, %v637
    %v654 = vadd.f32 %v578, %v638
    %v655 = vadd.f32 %v583, %v639
    %v656 = vadd.f32 %v586, %v640
    %v657 = vadd.f32 %v591, %v641
    %v658 = vadd.f32 %v594, %v642
    %v659 = vadd.f32 %v599, %v643
    %v660 = vadd.f32 %v602, %v644
    %v661 = vadd.f32 %v607, %v645
    %v662 = vadd.f32 %v610, %v646
    %v663 = vadd.f32 %v615, %v647
    %v664 = vadd.f32 %v618, %v648
    %v665 = vadd.f32 %v623, %v649
    %v666 = vadd.f32 %v626, %v650
    %v667 = vadd.f32 %v631, %v651
    %v668 = vadd.f32 %v634, %v652
    %v669 = vpack.c.bf16 %v654, %v653
    %v670 = vpack.c.bf16 %v656, %v655
    %v671 = vpack.c.bf16 %v658, %v657
    %v672 = vpack.c.bf16 %v660, %v659
    %v673 = vpack.c.bf16 %v662, %v661
    %v674 = vpack.c.bf16 %v664, %v663
    %v675 = vpack.c.bf16 %v666, %v665
    %v676 = vpack.c.bf16 %v668, %v667
    %v677 = vld [vmem:[#allocation11] sm:$0xf]
    %v678 = vld [vmem:[#allocation11 + $0x4] sm:$0xf]
    %v679 = vld [vmem:[#allocation11 + $0x8] sm:$0xf]
    %v680 = vld [vmem:[#allocation11 + $0xc] sm:$0xf]
    %v681 = vld [vmem:[#allocation11 + $0x10] sm:$0xf]
    %v682 = vld [vmem:[#allocation11 + $0x14] sm:$0xf]
    %v683 = vld [vmem:[#allocation11 + $0x18] sm:$0xf]
    %v684 = vld [vmem:[#allocation11 + $0x1c] sm:$0xf]
    %v685 = vld [vmem:[#allocation11 + $0x20] sm:$0xf]
    %v686 = vld [vmem:[#allocation11 + $0x24] sm:$0xf]
    %v687 = vld [vmem:[#allocation11 + $0x28] sm:$0xf]
    %v688 = vld [vmem:[#allocation11 + $0x2c] sm:$0xf]
    %v689 = vld [vmem:[#allocation11 + $0x30] sm:$0xf]
    %v690 = vld [vmem:[#allocation11 + $0x34] sm:$0xf]
    %v691 = vld [vmem:[#allocation11 + $0x38] sm:$0xf]
    %v692 = vld [vmem:[#allocation11 + $0x3c] sm:$0xf]
    %v693 = vld [vmem:[#allocation13] sm:$0xf]
    %v694 = vld [vmem:[#allocation13 + $0x4] sm:$0xf]
    %v695 = vld [vmem:[#allocation13 + $0x8] sm:$0xf]
    %v696 = vld [vmem:[#allocation13 + $0xc] sm:$0xf]
    %v697 = vld [vmem:[#allocation13 + $0x10] sm:$0xf]
    %v698 = vld [vmem:[#allocation13 + $0x14] sm:$0xf]
    %v699 = vld [vmem:[#allocation13 + $0x18] sm:$0xf]
    %v700 = vld [vmem:[#allocation13 + $0x1c] sm:$0xf]
    %v701 = vld [vmem:[#allocation13 + $0x20] sm:$0xf]
    %v702 = vld [vmem:[#allocation13 + $0x24] sm:$0xf]
    %v703 = vld [vmem:[#allocation13 + $0x28] sm:$0xf]
    %v704 = vld [vmem:[#allocation13 + $0x2c] sm:$0xf]
    %v705 = vld [vmem:[#allocation13 + $0x30] sm:$0xf]
    %v706 = vld [vmem:[#allocation13 + $0x34] sm:$0xf]
    %v707 = vld [vmem:[#allocation13 + $0x38] sm:$0xf]
    %v708 = vld [vmem:[#allocation13 + $0x3c] sm:$0xf]
    %v725 = vunpack.c.l.b16 %v693
    %v726 = vunpack.c.l.b16 %v694
    %v727 = vunpack.c.l.b16 %v695
    %v728 = vunpack.c.l.b16 %v696
    %v729 = vunpack.c.l.b16 %v697
    %v730 = vunpack.c.l.b16 %v698
    %v731 = vunpack.c.l.b16 %v699
    %v732 = vunpack.c.l.b16 %v700
    %v733 = vunpack.c.l.b16 %v701
    %v734 = vunpack.c.l.b16 %v702
    %v735 = vunpack.c.l.b16 %v703
    %v736 = vunpack.c.l.b16 %v704
    %v737 = vunpack.c.l.b16 %v705
    %v738 = vunpack.c.l.b16 %v706
    %v739 = vunpack.c.l.b16 %v707
    %v740 = vunpack.c.l.b16 %v708
    %v741 = vpack.c.b16 %v726, %v725
    %v742 = vpack.c.b16 %v728, %v727
    %v743 = vpack.c.b16 %v730, %v729
    %v744 = vpack.c.b16 %v732, %v731
    %v745 = vpack.c.b16 %v734, %v733
    %v746 = vpack.c.b16 %v736, %v735
    %v747 = vpack.c.b16 %v738, %v737
    %v748 = vpack.c.b16 %v740, %v739
    %757 = vmatprep.subr.bf16.mxu0 0
    %758 = vmatpush1.bf16.msra.mxu0 %v741
    %759 = vmatprep.subr.bf16.mxu0 0
    %760 = vmatpush1.bf16.msra.mxu0 %v742
    %761 = vmatprep.subr.bf16.mxu0 0
    %762 = vmatpush1.bf16.msra.mxu0 %v743
    %763 = vmatprep.subr.bf16.mxu0 0
    %764 = vmatpush1.bf16.msra.mxu0 %v744
    %765 = vmatprep.subr.bf16.mxu0 0
    %766 = vmatpush1.bf16.msra.mxu0 %v745
    %767 = vmatprep.subr.bf16.mxu0 0
    %768 = vmatpush1.bf16.msra.mxu0 %v746
    %769 = vmatprep.subr.bf16.mxu0 0
    %770 = vmatpush1.bf16.msra.mxu0 %v747
    %771 = vmatprep.subr.bf16.mxu0 0
    %772 = vmatpush1.bf16.msra.mxu0 %v748
    %773 = vmatprep.subr.bf16.mxu0 0
    %774 = vmatpush1.bf16.msra.mxu0 0
    %775 = vmatprep.subr.bf16.mxu0 0
    %776 = vmatpush1.bf16.msra.mxu0 0
    %777 = vmatprep.subr.bf16.mxu0 0
    %778 = vmatpush1.bf16.msra.mxu0 0
    %779 = vmatprep.subr.bf16.mxu0 0
    %780 = vmatpush1.bf16.msra.mxu0 0
    %781 = vmatprep.subr.bf16.mxu0 0
    %782 = vmatpush1.bf16.msra.mxu0 0
    %783 = vmatprep.subr.bf16.mxu0 0
    %784 = vmatpush1.bf16.msra.mxu0 0
    %785 = vmatprep.subr.bf16.mxu0 0
    %786 = vmatpush1.bf16.msra.mxu0 0
    %787 = vmatprep.subr.bf16.mxu0 0
    %788 = vmatpush1.bf16.msra.mxu0 0
    %789 = vmatprep.mubr.bf16.mxu0 0
    %790 = vmatmul.mubr.bf16.gmra.mrb[0].mxu0 %v669
    %v791 = vpop.f32.mrb[0].mxu0
    %v792 = vadd.f32 0.0, %v791
    %v793 = vpop.f32.mrb[0].mxu0
    %v794 = vpop.f32.mrb[0].mxu0
    %v795 = vadd.f32 0.0, %v794
    %v796 = vpop.f32.mrb[0].mxu0
    %797 = vmatprep.mubr.bf16.mxu0 0
    %798 = vmatmul.mubr.bf16.gmra.mrb[0].mxu0 %v670
    %v799 = vpop.f32.mrb[0].mxu0
    %v800 = vadd.f32 0.0, %v799
    %v801 = vpop.f32.mrb[0].mxu0
    %v802 = vpop.f32.mrb[0].mxu0
    %v803 = vadd.f32 0.0, %v802
    %v804 = vpop.f32.mrb[0].mxu0
    %805 = vmatprep.mubr.bf16.mxu0 0
    %806 = vmatmul.mubr.bf16.gmra.mrb[0].mxu0 %v671
    %v807 = vpop.f32.mrb[0].mxu0
    %v808 = vadd.f32 0.0, %v807
    %v809 = vpop.f32.mrb[0].mxu0
    %v810 = vpop.f32.mrb[0].mxu0
    %v811 = vadd.f32 0.0, %v810
    %v812 = vpop.f32.mrb[0].mxu0
    %813 = vmatprep.mubr.bf16.mxu0 0
    %814 = vmatmul.mubr.bf16.gmra.mrb[0].mxu0 %v672
    %v815 = vpop.f32.mrb[0].mxu0
    %v816 = vadd.f32 0.0, %v815
    %v817 = vpop.f32.mrb[0].mxu0
    %v818 = vpop.f32.mrb[0].mxu0
    %v819 = vadd.f32 0.0, %v818
    %v820 = vpop.f32.mrb[0].mxu0
    %821 = vmatprep.mubr.bf16.mxu0 0
    %822 = vmatmul.mubr.bf16.gmra.mrb[0].mxu0 %v673
    %v823 = vpop.f32.mrb[0].mxu0
    %v824 = vadd.f32 0.0, %v823
    %v825 = vpop.f32.mrb[0].mxu0
    %v826 = vpop.f32.mrb[0].mxu0
    %v827 = vadd.f32 0.0, %v826
    %v828 = vpop.f32.mrb[0].mxu0
    %829 = vmatprep.mubr.bf16.mxu0 0
    %830 = vmatmul.mubr.bf16.gmra.mrb[0].mxu0 %v674
    %v831 = vpop.f32.mrb[0].mxu0
    %v832 = vadd.f32 0.0, %v831
    %v833 = vpop.f32.mrb[0].mxu0
    %v834 = vpop.f32.mrb[0].mxu0
    %v835 = vadd.f32 0.0, %v834
    %v836 = vpop.f32.mrb[0].mxu0
    %837 = vmatprep.mubr.bf16.mxu0 0
    %838 = vmatmul.mubr.bf16.gmra.mrb[0].mxu0 %v675
    %v839 = vpop.f32.mrb[0].mxu0
    %v840 = vadd.f32 0.0, %v839
    %v841 = vpop.f32.mrb[0].mxu0
    %v842 = vpop.f32.mrb[0].mxu0
    %v843 = vadd.f32 0.0, %v842
    %v844 = vpop.f32.mrb[0].mxu0
    %845 = vmatprep.mubr.bf16.mxu0 0
    %846 = vmatmul.mubr.bf16.gmra.mrb[0].mxu0 %v676
    %v847 = vpop.f32.mrb[0].mxu0
    %v848 = vadd.f32 0.0, %v847
    %v849 = vpop.f32.mrb[0].mxu0
    %v850 = vpop.f32.mrb[0].mxu0
    %v851 = vadd.f32 0.0, %v850
    %v852 = vpop.f32.mrb[0].mxu0
    %853 = vdwg.mxu0
    %v870 = vunpack.c.l.b16 %v677
    %v871 = vunpack.c.l.b16 %v678
    %v872 = vunpack.c.l.b16 %v679
    %v873 = vunpack.c.l.b16 %v680
    %v874 = vunpack.c.l.b16 %v681
    %v875 = vunpack.c.l.b16 %v682
    %v876 = vunpack.c.l.b16 %v683
    %v877 = vunpack.c.l.b16 %v684
    %v878 = vunpack.c.l.b16 %v685
    %v879 = vunpack.c.l.b16 %v686
    %v880 = vunpack.c.l.b16 %v687
    %v881 = vunpack.c.l.b16 %v688
    %v882 = vunpack.c.l.b16 %v689
    %v883 = vunpack.c.l.b16 %v690
    %v884 = vunpack.c.l.b16 %v691
    %v885 = vunpack.c.l.b16 %v692
    %v886 = vpack.c.b16 %v871, %v870
    %v887 = vpack.c.b16 %v873, %v872
    %v888 = vpack.c.b16 %v875, %v874
    %v889 = vpack.c.b16 %v877, %v876
    %v890 = vpack.c.b16 %v879, %v878
    %v891 = vpack.c.b16 %v881, %v880
    %v892 = vpack.c.b16 %v883, %v882
    %v893 = vpack.c.b16 %v885, %v884
    %902 = vmatprep.subr.bf16.mxu0 0
    %903 = vmatpush1.bf16.msra.mxu0 %v886
    %904 = vmatprep.subr.bf16.mxu0 0
    %905 = vmatpush1.bf16.msra.mxu0 %v887
    %906 = vmatprep.subr.bf16.mxu0 0
    %907 = vmatpush1.bf16.msra.mxu0 %v888
    %908 = vmatprep.subr.bf16.mxu0 0
    %909 = vmatpush1.bf16.msra.mxu0 %v889
    %910 = vmatprep.subr.bf16.mxu0 0
    %911 = vmatpush1.bf16.msra.mxu0 %v890
    %912 = vmatprep.subr.bf16.mxu0 0
    %913 = vmatpush1.bf16.msra.mxu0 %v891
    %914 = vmatprep.subr.bf16.mxu0 0
    %915 = vmatpush1.bf16.msra.mxu0 %v892
    %916 = vmatprep.subr.bf16.mxu0 0
    %917 = vmatpush1.bf16.msra.mxu0 %v893
    %918 = vmatprep.subr.bf16.mxu0 0
    %919 = vmatpush1.bf16.msra.mxu0 0
    %920 = vmatprep.subr.bf16.mxu0 0
    %921 = vmatpush1.bf16.msra.mxu0 0
    %922 = vmatprep.subr.bf16.mxu0 0
    %923 = vmatpush1.bf16.msra.mxu0 0
    %924 = vmatprep.subr.bf16.mxu0 0
    %925 = vmatpush1.bf16.msra.mxu0 0
    %926 = vmatprep.subr.bf16.mxu0 0
    %927 = vmatpush1.bf16.msra.mxu0 0
    %928 = vmatprep.subr.bf16.mxu0 0
    %929 = vmatpush1.bf16.msra.mxu0 0
    %930 = vmatprep.subr.bf16.mxu0 0
    %931 = vmatpush1.bf16.msra.mxu0 0
    %932 = vmatprep.subr.bf16.mxu0 0
    %933 = vmatpush1.bf16.msra.mxu0 0
    %934 = vmatprep.mubr.bf16.mxu0 0
    %935 = vmatmul.mubr.bf16.gmra.mrb[0].mxu0 %v398
    %v936 = vpop.f32.mrb[0].mxu0
    %v937 = vadd.f32 %v792, %v936
    %v938 = vpop.f32.mrb[0].mxu0
    %v939 = vpop.f32.mrb[0].mxu0
    %v940 = vadd.f32 %v795, %v939
    %v941 = vpop.f32.mrb[0].mxu0
    %942 = vmatprep.mubr.bf16.mxu0 0
    %943 = vmatmul.mubr.bf16.gmra.mrb[0].mxu0 %v399
    %v944 = vpop.f32.mrb[0].mxu0
    %v945 = vadd.f32 %v800, %v944
    %v946 = vpop.f32.mrb[0].mxu0
    %v947 = vpop.f32.mrb[0].mxu0
    %v948 = vadd.f32 %v803, %v947
    %v949 = vpop.f32.mrb[0].mxu0
    %950 = vmatprep.mubr.bf16.mxu0 0
    %951 = vmatmul.mubr.bf16.gmra.mrb[0].mxu0 %v400
    %v952 = vpop.f32.mrb[0].mxu0
    %v953 = vadd.f32 %v808, %v952
    %v954 = vpop.f32.mrb[0].mxu0
    %v955 = vpop.f32.mrb[0].mxu0
    %v956 = vadd.f32 %v811, %v955
    %v957 = vpop.f32.mrb[0].mxu0
    %958 = vmatprep.mubr.bf16.mxu0 0
    %959 = vmatmul.mubr.bf16.gmra.mrb[0].mxu0 %v401
    %v960 = vpop.f32.mrb[0].mxu0
    %v961 = vadd.f32 %v816, %v960
    %v962 = vpop.f32.mrb[0].mxu0
    %v963 = vpop.f32.mrb[0].mxu0
    %v964 = vadd.f32 %v819, %v963
    %v965 = vpop.f32.mrb[0].mxu0
    %966 = vmatprep.mubr.bf16.mxu0 0
    %967 = vmatmul.mubr.bf16.gmra.mrb[0].mxu0 %v402
    %v968 = vpop.f32.mrb[0].mxu0
    %v969 = vadd.f32 %v824, %v968
    %v970 = vpop.f32.mrb[0].mxu0
    %v971 = vpop.f32.mrb[0].mxu0
    %v972 = vadd.f32 %v827, %v971
    %v973 = vpop.f32.mrb[0].mxu0
    %974 = vmatprep.mubr.bf16.mxu0 0
    %975 = vmatmul.mubr.bf16.gmra.mrb[0].mxu0 %v403
    %v976 = vpop.f32.mrb[0].mxu0
    %v977 = vadd.f32 %v832, %v976
    %v978 = vpop.f32.mrb[0].mxu0
    %v979 = vpop.f32.mrb[0].mxu0
    %v980 = vadd.f32 %v835, %v979
    %v981 = vpop.f32.mrb[0].mxu0
    %982 = vmatprep.mubr.bf16.mxu0 0
    %983 = vmatmul.mubr.bf16.gmra.mrb[0].mxu0 %v404
    %v984 = vpop.f32.mrb[0].mxu0
    %v985 = vadd.f32 %v840, %v984
    %v986 = vpop.f32.mrb[0].mxu0
    %v987 = vpop.f32.mrb[0].mxu0
    %v988 = vadd.f32 %v843, %v987
    %v989 = vpop.f32.mrb[0].mxu0
    %990 = vmatprep.mubr.bf16.mxu0 0
    %991 = vmatmul.mubr.bf16.gmra.mrb[0].mxu0 %v405
    %v992 = vpop.f32.mrb[0].mxu0
    %v993 = vadd.f32 %v848, %v992
    %v994 = vpop.f32.mrb[0].mxu0
    %v995 = vpop.f32.mrb[0].mxu0
    %v996 = vadd.f32 %v851, %v995
    %v997 = vpop.f32.mrb[0].mxu0
    %998 = vdwg.mxu0
    %v1000 = vlaneseq
    %v1001 = vshrl.u32 %v1000, 7
    %v1002 = vsub.s32 0, %v1001
    %v1003 = vrot.slane %v148, %v1002
    %v1005 = vadd.f32 %v937, %v1003
    %v1006 = vadd.f32 %v940, %v1003
    %v1007 = vadd.f32 %v945, %v1003
    %v1008 = vadd.f32 %v948, %v1003
    %v1009 = vadd.f32 %v953, %v1003
    %v1010 = vadd.f32 %v956, %v1003
    %v1011 = vadd.f32 %v961, %v1003
    %v1012 = vadd.f32 %v964, %v1003
    %v1013 = vadd.f32 %v969, %v1003
    %v1014 = vadd.f32 %v972, %v1003
    %v1015 = vadd.f32 %v977, %v1003
    %v1016 = vadd.f32 %v980, %v1003
    %v1017 = vadd.f32 %v985, %v1003
    %v1018 = vadd.f32 %v988, %v1003
    %v1019 = vadd.f32 %v993, %v1003
    %v1020 = vadd.f32 %v996, %v1003
    %v1021 = vmax.f32 %v1005, 0.0
    %v1022 = vmax.f32 %v1006, 0.0
    %v1023 = vmax.f32 %v1007, 0.0
    %v1024 = vmax.f32 %v1008, 0.0
    %v1025 = vmax.f32 %v1009, 0.0
    %v1026 = vmax.f32 %v1010, 0.0
    %v1027 = vmax.f32 %v1011, 0.0
    %v1028 = vmax.f32 %v1012, 0.0
    %v1029 = vmax.f32 %v1013, 0.0
    %v1030 = vmax.f32 %v1014, 0.0
    %v1031 = vmax.f32 %v1015, 0.0
    %v1032 = vmax.f32 %v1016, 0.0
    %v1033 = vmax.f32 %v1017, 0.0
    %v1034 = vmax.f32 %v1018, 0.0
    %v1035 = vmax.f32 %v1019, 0.0
    %v1036 = vmax.f32 %v1020, 0.0
    %v1037 = vpack.c.bf16 %v1022, %v1021
    %v1038 = vpack.c.bf16 %v1024, %v1023
    %v1039 = vpack.c.bf16 %v1026, %v1025
    %v1040 = vpack.c.bf16 %v1028, %v1027
    %v1041 = vpack.c.bf16 %v1030, %v1029
    %v1042 = vpack.c.bf16 %v1032, %v1031
    %v1043 = vpack.c.bf16 %v1034, %v1033
    %v1044 = vpack.c.bf16 %v1036, %v1035
    %v1045 = vld [vmem:[#allocation14] sm:$0xf]
    %v1046 = vld [vmem:[#allocation14 + $0x4] sm:$0xf]
    %v1047 = vld [vmem:[#allocation14 + $0x8] sm:$0xf]
    %v1048 = vld [vmem:[#allocation14 + $0xc] sm:$0xf]
    %v1049 = vld [vmem:[#allocation14 + $0x10] sm:$0xf]
    %v1050 = vld [vmem:[#allocation14 + $0x14] sm:$0xf]
    %v1051 = vld [vmem:[#allocation14 + $0x18] sm:$0xf]
    %v1052 = vld [vmem:[#allocation14 + $0x1c] sm:$0xf]
    %v1053 = vld [vmem:[#allocation14 + $0x20] sm:$0xf]
    %v1054 = vld [vmem:[#allocation14 + $0x24] sm:$0xf]
    %v1055 = vld [vmem:[#allocation14 + $0x28] sm:$0xf]
    %v1056 = vld [vmem:[#allocation14 + $0x2c] sm:$0xf]
    %v1057 = vld [vmem:[#allocation14 + $0x30] sm:$0xf]
    %v1058 = vld [vmem:[#allocation14 + $0x34] sm:$0xf]
    %v1059 = vld [vmem:[#allocation14 + $0x38] sm:$0xf]
    %v1060 = vld [vmem:[#allocation14 + $0x3c] sm:$0xf]
    %v1062 = vlaneseq
    %v1063 = vshrl.u32 %v1062, 7
    %v1064 = vsub.s32 0, %v1063
    %v1065 = vrot.slane %v149, %v1064
    %v1083 = vunpack.c.l.b16 %v1045
    %v1084 = vunpack.c.l.b16 %v1046
    %v1085 = vunpack.c.l.b16 %v1047
    %v1086 = vunpack.c.l.b16 %v1048
    %v1087 = vunpack.c.l.b16 %v1049
    %v1088 = vunpack.c.l.b16 %v1050
    %v1089 = vunpack.c.l.b16 %v1051
    %v1090 = vunpack.c.l.b16 %v1052
    %v1091 = vunpack.c.l.b16 %v1053
    %v1092 = vunpack.c.l.b16 %v1054
    %v1093 = vunpack.c.l.b16 %v1055
    %v1094 = vunpack.c.l.b16 %v1056
    %v1095 = vunpack.c.l.b16 %v1057
    %v1096 = vunpack.c.l.b16 %v1058
    %v1097 = vunpack.c.l.b16 %v1059
    %v1098 = vunpack.c.l.b16 %v1060
    %v1099 = vpack.c.b16 %v1084, %v1083
    %v1100 = vpack.c.b16 %v1086, %v1085
    %v1101 = vpack.c.b16 %v1088, %v1087
    %v1102 = vpack.c.b16 %v1090, %v1089
    %v1103 = vpack.c.b16 %v1092, %v1091
    %v1104 = vpack.c.b16 %v1094, %v1093
    %v1105 = vpack.c.b16 %v1096, %v1095
    %v1106 = vpack.c.b16 %v1098, %v1097
    %1115 = vmatprep.subr.bf16.mxu0 0
    %1116 = vmatpush1.bf16.msra.mxu0 %v1099
    %1117 = vmatprep.subr.bf16.mxu0 0
    %1118 = vmatpush1.bf16.msra.mxu0 %v1100
    %1119 = vmatprep.subr.bf16.mxu0 0
    %1120 = vmatpush1.bf16.msra.mxu0 %v1101
    %1121 = vmatprep.subr.bf16.mxu0 0
    %1122 = vmatpush1.bf16.msra.mxu0 %v1102
    %1123 = vmatprep.subr.bf16.mxu0 0
    %1124 = vmatpush1.bf16.msra.mxu0 %v1103
    %1125 = vmatprep.subr.bf16.mxu0 0
    %1126 = vmatpush1.bf16.msra.mxu0 %v1104
    %1127 = vmatprep.subr.bf16.mxu0 0
    %1128 = vmatpush1.bf16.msra.mxu0 %v1105
    %1129 = vmatprep.subr.bf16.mxu0 0
    %1130 = vmatpush1.bf16.msra.mxu0 %v1106
    %1131 = vmatprep.subr.bf16.mxu0 0
    %1132 = vmatpush1.bf16.msra.mxu0 0
    %1133 = vmatprep.subr.bf16.mxu0 0
    %1134 = vmatpush1.bf16.msra.mxu0 0
    %1135 = vmatprep.subr.bf16.mxu0 0
    %1136 = vmatpush1.bf16.msra.mxu0 0
    %1137 = vmatprep.subr.bf16.mxu0 0
    %1138 = vmatpush1.bf16.msra.mxu0 0
    %1139 = vmatprep.subr.bf16.mxu0 0
    %1140 = vmatpush1.bf16.msra.mxu0 0
    %1141 = vmatprep.subr.bf16.mxu0 0
    %1142 = vmatpush1.bf16.msra.mxu0 0
    %1143 = vmatprep.subr.bf16.mxu0 0
    %1144 = vmatpush1.bf16.msra.mxu0 0
    %1145 = vmatprep.subr.bf16.mxu0 0
    %1146 = vmatpush1.bf16.msra.mxu0 0
    %1147 = vmatprep.mubr.bf16.mxu0 0
    %1148 = vmatmul.mubr.bf16.gmra.mrb[0].mxu0 %v1037
    %v1149 = vpop.f32.mrb[0].mxu0
    %v1150 = vadd.f32 %v1065, %v1149
    %v1151 = vpop.f32.mrb[0].mxu0
    %v1152 = vpop.f32.mrb[0].mxu0
    %v1153 = vadd.f32 %v1065, %v1152
    %v1154 = vpop.f32.mrb[0].mxu0
    %1155 = vmatprep.mubr.bf16.mxu0 0
    %1156 = vmatmul.mubr.bf16.gmra.mrb[0].mxu0 %v1038
    %v1157 = vpop.f32.mrb[0].mxu0
    %v1158 = vadd.f32 %v1065, %v1157
    %v1159 = vpop.f32.mrb[0].mxu0
    %v1160 = vpop.f32.mrb[0].mxu0
    %v1161 = vadd.f32 %v1065, %v1160
    %v1162 = vpop.f32.mrb[0].mxu0
    %1163 = vmatprep.mubr.bf16.mxu0 0
    %1164 = vmatmul.mubr.bf16.gmra.mrb[0].mxu0 %v1039
    %v1165 = vpop.f32.mrb[0].mxu0
    %v1166 = vadd.f32 %v1065, %v1165
    %v1167 = vpop.f32.mrb[0].mxu0
    %v1168 = vpop.f32.mrb[0].mxu0
    %v1169 = vadd.f32 %v1065, %v1168
    %v1170 = vpop.f32.mrb[0].mxu0
    %1171 = vmatprep.mubr.bf16.mxu0 0
    %1172 = vmatmul.mubr.bf16.gmra.mrb[0].mxu0 %v1040
    %v1173 = vpop.f32.mrb[0].mxu0
    %v1174 = vadd.f32 %v1065, %v1173
    %v1175 = vpop.f32.mrb[0].mxu0
    %v1176 = vpop.f32.mrb[0].mxu0
    %v1177 = vadd.f32 %v1065, %v1176
    %v1178 = vpop.f32.mrb[0].mxu0
    %1179 = vmatprep.mubr.bf16.mxu0 0
    %1180 = vmatmul.mubr.bf16.gmra.mrb[0].mxu0 %v1041
    %v1181 = vpop.f32.mrb[0].mxu0
    %v1182 = vadd.f32 %v1065, %v1181
    %v1183 = vpop.f32.mrb[0].mxu0
    %v1184 = vpop.f32.mrb[0].mxu0
    %v1185 = vadd.f32 %v1065, %v1184
    %v1186 = vpop.f32.mrb[0].mxu0
    %1187 = vmatprep.mubr.bf16.mxu0 0
    %1188 = vmatmul.mubr.bf16.gmra.mrb[0].mxu0 %v1042
    %v1189 = vpop.f32.mrb[0].mxu0
    %v1190 = vadd.f32 %v1065, %v1189
    %v1191 = vpop.f32.mrb[0].mxu0
    %v1192 = vpop.f32.mrb[0].mxu0
    %v1193 = vadd.f32 %v1065, %v1192
    %v1194 = vpop.f32.mrb[0].mxu0
    %1195 = vmatprep.mubr.bf16.mxu0 0
    %1196 = vmatmul.mubr.bf16.gmra.mrb[0].mxu0 %v1043
    %v1197 = vpop.f32.mrb[0].mxu0
    %v1198 = vadd.f32 %v1065, %v1197
    %v1199 = vpop.f32.mrb[0].mxu0
    %v1200 = vpop.f32.mrb[0].mxu0
    %v1201 = vadd.f32 %v1065, %v1200
    %v1202 = vpop.f32.mrb[0].mxu0
    %1203 = vmatprep.mubr.bf16.mxu0 0
    %1204 = vmatmul.mubr.bf16.gmra.mrb[0].mxu0 %v1044
    %v1205 = vpop.f32.mrb[0].mxu0
    %v1206 = vadd.f32 %v1065, %v1205
    %v1207 = vpop.f32.mrb[0].mxu0
    %v1208 = vpop.f32.mrb[0].mxu0
    %v1209 = vadd.f32 %v1065, %v1208
    %v1210 = vpop.f32.mrb[0].mxu0
    %1211 = vdwg.mxu0
    %v1212 = vmax.f32 %v1150, 0.0
    %v1213 = vmax.f32 %v1153, 0.0
    %v1214 = vmax.f32 %v1158, 0.0
    %v1215 = vmax.f32 %v1161, 0.0
    %v1216 = vmax.f32 %v1166, 0.0
    %v1217 = vmax.f32 %v1169, 0.0
    %v1218 = vmax.f32 %v1174, 0.0
    %v1219 = vmax.f32 %v1177, 0.0
    %v1220 = vmax.f32 %v1182, 0.0
    %v1221 = vmax.f32 %v1185, 0.0
    %v1222 = vmax.f32 %v1190, 0.0
    %v1223 = vmax.f32 %v1193, 0.0
    %v1224 = vmax.f32 %v1198, 0.0
    %v1225 = vmax.f32 %v1201, 0.0
    %v1226 = vmax.f32 %v1206, 0.0
    %v1227 = vmax.f32 %v1209, 0.0
    %v1228 = vpack.c.bf16 %v1213, %v1212
    %v1229 = vpack.c.bf16 %v1215, %v1214
    %v1230 = vpack.c.bf16 %v1217, %v1216
    %v1231 = vpack.c.bf16 %v1219, %v1218
    %v1232 = vpack.c.bf16 %v1221, %v1220
    %v1233 = vpack.c.bf16 %v1223, %v1222
    %v1234 = vpack.c.bf16 %v1225, %v1224
    %v1235 = vpack.c.bf16 %v1227, %v1226
    %v1236 = vld [vmem:[%s8] sm:$0x1]
    %1238 = vset.pattern.permute.xlu0 0
    %1239 = vperm.xlu0 %1238, %v150
    %v1240 = vpop.permute.xlu0 %1239
    %v1242 = vlaneseq
    %v1243 = vshrl.u32 %v1242, 7
    %v1244 = vsub.s32 0, %v1243
    %v1245 = vrot.slane %v1240, %v1244
    %1246 = vmatprep.subr.bf16.mxu0 0
    %1247 = vmatpush1.bf16.xpose.msra.mxu0 %v1228
    %1248 = vmatprep.subr.bf16.mxu0 0
    %1249 = vmatpush1.bf16.xpose.msra.mxu0 %v1229
    %1250 = vmatprep.subr.bf16.mxu0 0
    %1251 = vmatpush1.bf16.xpose.msra.mxu0 %v1230
    %1252 = vmatprep.subr.bf16.mxu0 0
    %1253 = vmatpush1.bf16.xpose.msra.mxu0 %v1231
    %1254 = vmatprep.subr.bf16.mxu0 0
    %1255 = vmatpush1.bf16.xpose.msra.mxu0 %v1232
    %1256 = vmatprep.subr.bf16.mxu0 0
    %1257 = vmatpush1.bf16.xpose.msra.mxu0 %v1233
    %1258 = vmatprep.subr.bf16.mxu0 0
    %1259 = vmatpush1.bf16.xpose.msra.mxu0 %v1234
    %1260 = vmatprep.subr.bf16.mxu0 0
    %1261 = vmatpush1.bf16.xpose.msra.mxu0 %v1235
    %1262 = vmatprep.subr.bf16.mxu0 0
    %1263 = vmatpush1.bf16.xpose.msra.mxu0 0
    %1264 = vmatprep.subr.bf16.mxu0 0
    %1265 = vmatpush1.bf16.xpose.msra.mxu0 0
    %1266 = vmatprep.subr.bf16.mxu0 0
    %1267 = vmatpush1.bf16.xpose.msra.mxu0 0
    %1268 = vmatprep.subr.bf16.mxu0 0
    %1269 = vmatpush1.bf16.xpose.msra.mxu0 0
    %1270 = vmatprep.subr.bf16.mxu0 0
    %1271 = vmatpush1.bf16.xpose.msra.mxu0 0
    %1272 = vmatprep.subr.bf16.mxu0 0
    %1273 = vmatpush1.bf16.xpose.msra.mxu0 0
    %1274 = vmatprep.subr.bf16.mxu0 0
    %1275 = vmatpush1.bf16.xpose.msra.mxu0 0
    %1276 = vmatprep.subr.bf16.mxu0 0
    %1277 = vmatpush1.bf16.xpose.msra.mxu0 0
    %1278 = vmatprep.mubr.bf16.mxu0 0
    %1279 = vmatmul.mubr.bf16.gmra.mrb[0].mxu0 %v1236
    %v1280 = vpop.f32.mrb[0].mxu0
    %v1281 = vadd.f32 %v1245, %v1280
    %v1282 = vpop.f32.mrb[0].mxu0
    %v1283 = vpop.f32.mrb[0].mxu0
    %v1284 = vpop.f32.mrb[0].mxu0
    %1285 = vdwg.mxu0
    %1286 = vst [vmem:[#allocation16] sm:$0x1] %v1281
    // Predicated region
    $region74: #{tpu_custom_call.1} parent=1 // pred_check
      _
    $region75: #{tpu_custom_call.1} parent=1 // pred_check_branch
      %1288 = sbr.rel (0) target = $region77
    $region76: #{tpu_custom_call.1} parent=1 // pred_region
      %s1290 = ssub.s32 16, 16
      %1291 = vsyncadd [#allocation4], %s1290
      %s1293 = sshll.u32 [#allocation16], 4
      %s1294 = int_to_ptr.vmem [resolvable:$true] %s1293
      %1296 = dma.vmem_to_hbm [thread:$0]  %s1294, 16, %s10, [#allocation4]
    $region77: #{tpu_custom_call.1} parent=1 // pred_fallthru
      _
    // Predicated region
    $region78: #{tpu_custom_call.1} parent=1 // pred_check
      _
    $region79: #{tpu_custom_call.1} parent=1 // pred_check_branch
      %1298 = sbr.rel (0) target = $region81
    $region80: #{tpu_custom_call.1} parent=1 // pred_region
      %1299 = dma.done [#allocation4], 16
    $region81: #{tpu_custom_call.1} parent=1 // pred_fallthru
      _
    %1300 = vsyncpa [#allocation3], 1
    %1301 = vsyncpa [#allocation6], 1
    %1302 = vsyncpa [#allocation9], 1
    %1303 = vsyncpa [#allocation12], 1
    %1304 = vsyncpa [#allocation15], 1
    %1305 = vsyncpa [#allocation4], 1

// kernel: tpu_custom_call.1
$region0: #{tpu_custom_call.1}
  #allocation0 [shape = 'u32[]', space=smem, size = 0x4, offset = 0x4, fixed_abs, tag = 'smem constant byte address 0x4 - core index']
  #allocation1 [shape = 'u32[144,128]{1,0:T(1,128)}', space=vmem, size = 0x12000, scoped, tag = 'internal scratch']
  %s0 = inlined_call_operand.hbm [shape: bf16[128,128], index: 0, kind: input, shape index: {}]
  %s1 = inlined_call_operand.hbm [shape: f32[128,128], index: 1, kind: input, shape index: {}]
  %s2 = inlined_call_operand.hbm [shape: bf16[128,128], index: 2, kind: input, shape index: {}]
  %s3 = inlined_call_operand.hbm [shape: bf16[128,128], index: 3, kind: input, shape index: {}]
  %s4 = inlined_call_operand.hbm [shape: bf16[128,128], index: 4, kind: input, shape index: {}]
  %s5 = inlined_call_operand.hbm [shape: bf16[128,128], index: 5, kind: input, shape index: {}]
  %s6 = inlined_call_operand.hbm [shape: bf16[128,128], index: 6, kind: input, shape index: {}]
  %s7 = inlined_call_operand.hbm [shape: bf16[128,128], index: 7, kind: input, shape index: {}]
  %s8 = inlined_call_operand.vmem [shape: bf16[1,128], index: 8, kind: input, shape index: {}]
  %s9 = inlined_call_operand.vmem [shape: f32[1,640], index: 9, kind: input, shape index: {}]
  %s10 = inlined_call_operand.hbm [shape: f32[1,128], index: 10, kind: output, shape index: {}]
  %s11 = sld [smem:[#allocation0]]
  $region82: #{tpu_custom_call.1} parent=0
    _
  %s13 = ssub.s32 1, %s11
  %s14 = scalar_select 0, %s13, %s11
  $region1: #{tpu_custom_call.1} parent=0
    #allocation2 [shape = 'u8[32768]{0}', space=vmem, size = 0x8000, scoped, tag = 'input window, operand 0, single buffered']
    #allocation3 [shape = 's32[1]{0}', space=sflag, size = 0x4, scoped, tag = 'scoped memory for tpu_custom_call.1']
    #allocation4 [shape = 's32[1]{0}', space=sflag, size = 0x4, scoped, tag = 'scoped memory for tpu_custom_call.1']
    #allocation5 [shape = 'u8[65536]{0}', space=vmem, size = 0x10000, scoped, tag = 'input window, operand 1, single buffered']
    #allocation6 [shape = 's32[1]{0}', space=sflag, size = 0x4, scoped, tag = 'scoped memory for tpu_custom_call.1']
    #allocation7 [shape = 'u8[32768]{0}', space=vmem, size = 0x8000, scoped, tag = 'input window, operand 2, single buffered']
    #allocation8 [shape = 'u8[32768]{0}', space=vmem, size = 0x8000, scoped, tag = 'input window, operand 3, single buffered']
    #allocation9 [shape = 's32[1]{0}', space=sflag, size = 0x4, scoped, tag = 'scoped memory for tpu_custom_call.1']
    #allocation10 [shape = 'u8[32768]{0}', space=vmem, size = 0x8000, scoped, tag = 'input window, operand 4, single buffered']
    #allocation11 [shape = 'u8[32768]{0}', space=vmem, size = 0x8000, scoped, tag = 'input window, operand 5, single buffered']
    #allocation12 [shape = 's32[1]{0}', space=sflag, size = 0x4, scoped, tag = 'scoped memory for tpu_custom_call.1']
    #allocation13 [shape = 'u8[32768]{0}', space=vmem, size = 0x8000, scoped, tag = 'input window, operand 6, single buffered']
    #allocation14 [shape = 'u8[32768]{0}', space=vmem, size = 0x8000, scoped, tag = 'input window, operand 7, single buffered']
    #allocation15 [shape = 's32[1]{0}', space=sflag, size = 0x4, scoped, tag = 'scoped memory for tpu_custom_call.1']
    #allocation16 [shape = 'u8[512]{0}', space=vmem, size = 0x400, scoped, tag = 'output window, operand 0, single buffered']
    %15 = vsyncpa [#allocation3], 0
    %16 = vsyncpa [#allocation6], 0
    %17 = vsyncpa [#allocation9], 0
    %18 = vsyncpa [#allocation12], 0
    %19 = vsyncpa [#allocation15], 0
    %20 = vsyncpa [#allocation4], 0
    // Predicated region
    $region2: #{tpu_custom_call.1} parent=1 // pred_check
      _
    $region3: #{tpu_custom_call.1} parent=1 // pred_check_branch
      %22 = sbr.rel (0) target = $region5
    $region4: #{tpu_custom_call.1} parent=1 // pred_region
      %s24 = ssub.s32 1024, 1024
      %25 = vsyncadd [#allocation3], %s24
      %s26 = sshll.u32 [#allocation2], 4
      %s27 = int_to_ptr.vmem [resolvable:$true] %s26
      %32 = dma.hbm_to_vmem [thread:$0]  %s0, 1024, %s27, [#allocation3], 64, 64, 4
    $region5: #{tpu_custom_call.1} parent=1 // pred_fallthru
      _
    // Predicated region
    $region6: #{tpu_custom_call.1} parent=1 // pred_check
      _
    $region7: #{tpu_custom_call.1} parent=1 // pred_check_branch
      %34 = sbr.rel (0) target = $region9
    $region8: #{tpu_custom_call.1} parent=1 // pred_region
      %s36 = ssub.s32 2048, 2048
      %37 = vsyncadd [#allocation6], %s36
      %s38 = sshll.u32 [#allocation5], 4
      %s39 = int_to_ptr.vmem [resolvable:$true] %s38
      %44 = dma.hbm_to_vmem [thread:$0]  %s1, 2048, %s39, [#allocation6], 128, 128, 8
    $region9: #{tpu_custom_call.1} parent=1 // pred_fallthru
      _
    // Predicated region
    $region10: #{tpu_custom_call.1} parent=1 // pred_check
      _
    $region11: #{tpu_custom_call.1} parent=1 // pred_check_branch
      %46 = sbr.rel (0) target = $region13
    $region12: #{tpu_custom_call.1} parent=1 // pred_region
      %s48 = ssub.s32 1024, 1024
      %49 = vsyncadd [#allocation6], %s48
      %s50 = sshll.u32 [#allocation7], 4
      %s51 = int_to_ptr.vmem [resolvable:$true] %s50
      %56 = dma.hbm_to_vmem [thread:$0]  %s2, 1024, %s51, [#allocation6], 64, 64, 4
    $region13: #{tpu_custom_call.1} parent=1 // pred_fallthru
      _
    // Predicated region
    $region14: #{tpu_custom_call.1} parent=1 // pred_check
      _
    $region15: #{tpu_custom_call.1} parent=1 // pred_check_branch
      %58 = sbr.rel (0) target = $region17
    $region16: #{tpu_custom_call.1} parent=1 // pred_region
      %s60 = ssub.s32 1024, 1024
      %61 = vsyncadd [#allocation9], %s60
      %s62 = sshll.u32 [#allocation8], 4
      %s63 = int_to_ptr.vmem [resolvable:$true] %s62
      %68 = dma.hbm_to_vmem [thread:$0]  %s3, 1024, %s63, [#allocation9], 64, 64, 4
    $region17: #{tpu_custom_call.1} parent=1 // pred_fallthru
      _
    // Predicated region
    $region18: #{tpu_custom_call.1} parent=1 // pred_check
      _
    $region19: #{tpu_custom_call.1} parent=1 // pred_check_branch
      %70 = sbr.rel (0) target = $region21
    $region20: #{tpu_custom_call.1} parent=1 // pred_region
      %s72 = ssub.s32 1024, 1024
      %73 = vsyncadd [#allocation9], %s72
      %s74 = sshll.u32 [#allocation10], 4
      %s75 = int_to_ptr.vmem [resolvable:$true] %s74
      %80 = dma.hbm_to_vmem [thread:$0]  %s4, 1024, %s75, [#allocation9], 64, 64, 4
    $region21: #{tpu_custom_call.1} parent=1 // pred_fallthru
      _
    // Predicated region
    $region22: #{tpu_custom_call.1} parent=1 // pred_check
      _
    $region23: #{tpu_custom_call.1} parent=1 // pred_check_branch
      %82 = sbr.rel (0) target = $region25
    $region24: #{tpu_custom_call.1} parent=1 // pred_region
      %s84 = ssub.s32 1024, 1024
      %85 = vsyncadd [#allocation12], %s84
      %s86 = sshll.u32 [#allocation11], 4
      %s87 = int_to_ptr.vmem [resolvable:$true] %s86
      %92 = dma.hbm_to_vmem [thread:$0]  %s5, 1024, %s87, [#allocation12], 64, 64, 4
    $region25: #{tpu_custom_call.1} parent=1 // pred_fallthru
      _
    // Predicated region
    $region26: #{tpu_custom_call.1} parent=1 // pred_check
      _
    $region27: #{tpu_custom_call.1} parent=1 // pred_check_branch
      %94 = sbr.rel (0) target = $region29
    $region28: #{tpu_custom_call.1} parent=1 // pred_region
      %s96 = ssub.s32 1024, 1024
      %97 = vsyncadd [#allocation12], %s96
      %s98 = sshll.u32 [#allocation13], 4
      %s99 = int_to_ptr.vmem [resolvable:$true] %s98
      %104 = dma.hbm_to_vmem [thread:$0]  %s6, 1024, %s99, [#allocation12], 64, 64, 4
    $region29: #{tpu_custom_call.1} parent=1 // pred_fallthru
      _
    // Predicated region
    $region30: #{tpu_custom_call.1} parent=1 // pred_check
      _
    $region31: #{tpu_custom_call.1} parent=1 // pred_check_branch
      %106 = sbr.rel (0) target = $region33
    $region32: #{tpu_custom_call.1} parent=1 // pred_region
      %s108 = ssub.s32 1024, 1024
      %109 = vsyncadd [#allocation15], %s108
      %s110 = sshll.u32 [#allocation14], 4
      %s111 = int_to_ptr.vmem [resolvable:$true] %s110
      %116 = dma.hbm_to_vmem [thread:$0]  %s7, 1024, %s111, [#allocation15], 64, 64, 4
    $region33: #{tpu_custom_call.1} parent=1 // pred_fallthru
      _
    // Predicated region
    $region34: #{tpu_custom_call.1} parent=1 // pred_check
      _
    $region35: #{tpu_custom_call.1} parent=1 // pred_check_branch
      %118 = sbr.rel (0) target = $region37
    $region36: #{tpu_custom_call.1} parent=1 // pred_region
      _
    $region37: #{tpu_custom_call.1} parent=1 // pred_fallthru
      _
    // Predicated region
    $region38: #{tpu_custom_call.1} parent=1 // pred_check
      _
    $region39: #{tpu_custom_call.1} parent=1 // pred_check_branch
      %120 = sbr.rel (0) target = $region41
    $region40: #{tpu_custom_call.1} parent=1 // pred_region
      _
    $region41: #{tpu_custom_call.1} parent=1 // pred_fallthru
      _
    // Predicated region
    $region42: #{tpu_custom_call.1} parent=1 // pred_check
      _
    $region43: #{tpu_custom_call.1} parent=1 // pred_check_branch
      %122 = sbr.rel (0) target = $region45
    $region44: #{tpu_custom_call.1} parent=1 // pred_region
      %123 = dma.done [#allocation3], 1024
    $region45: #{tpu_custom_call.1} parent=1 // pred_fallthru
      _
    // Predicated region
    $region46: #{tpu_custom_call.1} parent=1 // pred_check
      _
    $region47: #{tpu_custom_call.1} parent=1 // pred_check_branch
      %125 = sbr.rel (0) target = $region49
    $region48: #{tpu_custom_call.1} parent=1 // pred_region
      %126 = dma.done [#allocation6], 2048
    $region49: #{tpu_custom_call.1} parent=1 // pred_fallthru
      _
    // Predicated region
    $region50: #{tpu_custom_call.1} parent=1 // pred_check
      _
    $region51: #{tpu_custom_call.1} parent=1 // pred_check_branch
      %128 = sbr.rel (0) target = $region53
    $region52: #{tpu_custom_call.1} parent=1 // pred_region
      %129 = dma.done [#allocation6], 1024
    $region53: #{tpu_custom_call.1} parent=1 // pred_fallthru
      _
    // Predicated region
    $region54: #{tpu_custom_call.1} parent=1 // pred_check
      _
    $region55: #{tpu_custom_call.1} parent=1 // pred_check_branch
      %131 = sbr.rel (0) target = $region57
    $region56: #{tpu_custom_call.1} parent=1 // pred_region
      %132 = dma.done [#allocation9], 1024
    $region57: #{tpu_custom_call.1} parent=1 // pred_fallthru
      _
    // Predicated region
    $region58: #{tpu_custom_call.1} parent=1 // pred_check
      _
    $region59: #{tpu_custom_call.1} parent=1 // pred_check_branch
      %134 = sbr.rel (0) target = $region61
    $region60: #{tpu_custom_call.1} parent=1 // pred_region
      %135 = dma.done [#allocation9], 1024
    $region61: #{tpu_custom_call.1} parent=1 // pred_fallthru
      _
    // Predicated region
    $region62: #{tpu_custom_call.1} parent=1 // pred_check
      _
    $region63: #{tpu_custom_call.1} parent=1 // pred_check_branch
      %137 = sbr.rel (0) target = $region65
    $region64: #{tpu_custom_call.1} parent=1 // pred_region
      %138 = dma.done [#allocation12], 1024
    $region65: #{tpu_custom_call.1} parent=1 // pred_fallthru
      _
    // Predicated region
    $region66: #{tpu_custom_call.1} parent=1 // pred_check
      _
    $region67: #{tpu_custom_call.1} parent=1 // pred_check_branch
      %140 = sbr.rel (0) target = $region69
    $region68: #{tpu_custom_call.1} parent=1 // pred_region
      %141 = dma.done [#allocation12], 1024
    $region69: #{tpu_custom_call.1} parent=1 // pred_fallthru
      _
    // Predicated region
    $region70: #{tpu_custom_call.1} parent=1 // pred_check
      _
    $region71: #{tpu_custom_call.1} parent=1 // pred_check_branch
      %143 = sbr.rel (0) target = $region73
    $region72: #{tpu_custom_call.1} parent=1 // pred_region
      %144 = dma.done [#allocation15], 1024
    $region73: #{tpu_custom_call.1} parent=1 // pred_fallthru
      _
    %v146 = vld [vmem:[%s9] sm:$0x1]
    %v147 = vld [vmem:[%s9 + $0x1] sm:$0x1]
    %v148 = vld [vmem:[%s9 + $0x2] sm:$0x1]
    %v149 = vld [vmem:[%s9 + $0x3] sm:$0x1]
    %v150 = vld [vmem:[%s9 + $0x4] sm:$0x1]
    %v151 = vld [vmem:[#allocation2] sm:$0xf]
    %v152 = vld [vmem:[#allocation2 + $0x4] sm:$0xf]
    %v153 = vld [vmem:[#allocation2 + $0x8] sm:$0xf]
    %v154 = vld [vmem:[#allocation2 + $0xc] sm:$0xf]
    %v155 = vld [vmem:[#allocation2 + $0x10] sm:$0xf]
    %v156 = vld [vmem:[#allocation2 + $0x14] sm:$0xf]
    %v157 = vld [vmem:[#allocation2 + $0x18] sm:$0xf]
    %v158 = vld [vmem:[#allocation2 + $0x1c] sm:$0xf]
    %v159 = vld [vmem:[#allocation2 + $0x20] sm:$0xf]
    %v160 = vld [vmem:[#allocation2 + $0x24] sm:$0xf]
    %v161 = vld [vmem:[#allocation2 + $0x28] sm:$0xf]
    %v162 = vld [vmem:[#allocation2 + $0x2c] sm:$0xf]
    %v163 = vld [vmem:[#allocation2 + $0x30] sm:$0xf]
    %v164 = vld [vmem:[#allocation2 + $0x34] sm:$0xf]
    %v165 = vld [vmem:[#allocation2 + $0x38] sm:$0xf]
    %v166 = vld [vmem:[#allocation2 + $0x3c] sm:$0xf]
    %v167 = vld [vmem:[#allocation8] sm:$0xf]
    %v168 = vld [vmem:[#allocation8 + $0x4] sm:$0xf]
    %v169 = vld [vmem:[#allocation8 + $0x8] sm:$0xf]
    %v170 = vld [vmem:[#allocation8 + $0xc] sm:$0xf]
    %v171 = vld [vmem:[#allocation8 + $0x10] sm:$0xf]
    %v172 = vld [vmem:[#allocation8 + $0x14] sm:$0xf]
    %v173 = vld [vmem:[#allocation8 + $0x18] sm:$0xf]
    %v174 = vld [vmem:[#allocation8 + $0x1c] sm:$0xf]
    %v175 = vld [vmem:[#allocation8 + $0x20] sm:$0xf]
    %v176 = vld [vmem:[#allocation8 + $0x24] sm:$0xf]
    %v177 = vld [vmem:[#allocation8 + $0x28] sm:$0xf]
    %v178 = vld [vmem:[#allocation8 + $0x2c] sm:$0xf]
    %v179 = vld [vmem:[#allocation8 + $0x30] sm:$0xf]
    %v180 = vld [vmem:[#allocation8 + $0x34] sm:$0xf]
    %v181 = vld [vmem:[#allocation8 + $0x38] sm:$0xf]
    %v182 = vld [vmem:[#allocation8 + $0x3c] sm:$0xf]
    %v184 = vlaneseq
    %v185 = vshrl.u32 %v184, 7
    %v186 = vsub.s32 0, %v185
    %v187 = vrot.slane %v146, %v186
    %v205 = vunpack.c.l.b16 %v151
    %v206 = vunpack.c.l.b16 %v152
    %v207 = vunpack.c.l.b16 %v153
    %v208 = vunpack.c.l.b16 %v154
    %v209 = vunpack.c.l.b16 %v155
    %v210 = vunpack.c.l.b16 %v156
    %v211 = vunpack.c.l.b16 %v157
    %v212 = vunpack.c.l.b16 %v158
    %v213 = vunpack.c.l.b16 %v159
    %v214 = vunpack.c.l.b16 %v160
    %v215 = vunpack.c.l.b16 %v161
    %v216 = vunpack.c.l.b16 %v162
    %v217 = vunpack.c.l.b16 %v163
    %v218 = vunpack.c.l.b16 %v164
    %v219 = vunpack.c.l.b16 %v165
    %v220 = vunpack.c.l.b16 %v166
    %v221 = vpack.c.b16 %v206, %v205
    %v222 = vpack.c.b16 %v208, %v207
    %v223 = vpack.c.b16 %v210, %v209
    %v224 = vpack.c.b16 %v212, %v211
    %v225 = vpack.c.b16 %v214, %v213
    %v226 = vpack.c.b16 %v216, %v215
    %v227 = vpack.c.b16 %v218, %v217
    %v228 = vpack.c.b16 %v220, %v219
    %v253 = vunpack.c.l.b16 %v167
    %v254 = vunpack.c.l.b16 %v168
    %v255 = vunpack.c.l.b16 %v169
    %v256 = vunpack.c.l.b16 %v170
    %v257 = vunpack.c.l.b16 %v171
    %v258 = vunpack.c.l.b16 %v172
    %v259 = vunpack.c.l.b16 %v173
    %v260 = vunpack.c.l.b16 %v174
    %v261 = vunpack.c.l.b16 %v175
    %v262 = vunpack.c.l.b16 %v176
    %v263 = vunpack.c.l.b16 %v177
    %v264 = vunpack.c.l.b16 %v178
    %v265 = vunpack.c.l.b16 %v179
    %v266 = vunpack.c.l.b16 %v180
    %v267 = vunpack.c.l.b16 %v181
    %v268 = vunpack.c.l.b16 %v182
    %v269 = vpack.c.b16 %v254, %v253
    %v270 = vpack.c.b16 %v256, %v255
    %v271 = vpack.c.b16 %v258, %v257
    %v272 = vpack.c.b16 %v260, %v259
    %v273 = vpack.c.b16 %v262, %v261
    %v274 = vpack.c.b16 %v264, %v263
    %v275 = vpack.c.b16 %v266, %v265
    %v276 = vpack.c.b16 %v268, %v267
    %285 = vmatprep.subr.bf16.mxu0 0
    %286 = vmatpush1.bf16.msra.mxu0 %v269
    %287 = vmatprep.subr.bf16.mxu0 0
    %288 = vmatpush1.bf16.msra.mxu0 %v270
    %289 = vmatprep.subr.bf16.mxu0 0
    %290 = vmatpush1.bf16.msra.mxu0 %v271
    %291 = vmatprep.subr.bf16.mxu0 0
    %292 = vmatpush1.bf16.msra.mxu0 %v272
    %293 = vmatprep.subr.bf16.mxu0 0
    %294 = vmatpush1.bf16.msra.mxu0 %v273
    %295 = vmatprep.subr.bf16.mxu0 0
    %296 = vmatpush1.bf16.msra.mxu0 %v274
    %297 = vmatprep.subr.bf16.mxu0 0
    %298 = vmatpush1.bf16.msra.mxu0 %v275
    %299 = vmatprep.subr.bf16.mxu0 0
    %300 = vmatpush1.bf16.msra.mxu0 %v276
    %301 = vmatprep.subr.bf16.mxu0 0
    %302 = vmatpush1.bf16.msra.mxu0 0
    %303 = vmatprep.subr.bf16.mxu0 0
    %304 = vmatpush1.bf16.msra.mxu0 0
    %305 = vmatprep.subr.bf16.mxu0 0
    %306 = vmatpush1.bf16.msra.mxu0 0
    %307 = vmatprep.subr.bf16.mxu0 0
    %308 = vmatpush1.bf16.msra.mxu0 0
    %309 = vmatprep.subr.bf16.mxu0 0
    %310 = vmatpush1.bf16.msra.mxu0 0
    %311 = vmatprep.subr.bf16.mxu0 0
    %312 = vmatpush1.bf16.msra.mxu0 0
    %313 = vmatprep.subr.bf16.mxu0 0
    %314 = vmatpush1.bf16.msra.mxu0 0
    %315 = vmatprep.subr.bf16.mxu0 0
    %316 = vmatpush1.bf16.msra.mxu0 0
    %317 = vmatprep.mubr.bf16.mxu0 0
    %318 = vmatmul.mubr.bf16.gmra.mrb[0].mxu0 %v221
    %v319 = vpop.f32.mrb[0].mxu0
    %v320 = vadd.f32 %v187, %v319
    %v321 = vpop.f32.mrb[0].mxu0
    %v322 = vpop.f32.mrb[0].mxu0
    %v323 = vadd.f32 %v187, %v322
    %v324 = vpop.f32.mrb[0].mxu0
    %325 = vmatprep.mubr.bf16.mxu0 0
    %326 = vmatmul.mubr.bf16.gmra.mrb[0].mxu0 %v222
    %v327 = vpop.f32.mrb[0].mxu0
    %v328 = vadd.f32 %v187, %v327
    %v329 = vpop.f32.mrb[0].mxu0
    %v330 = vpop.f32.mrb[0].mxu0
    %v331 = vadd.f32 %v187, %v330
    %v332 = vpop.f32.mrb[0].mxu0
    %333 = vmatprep.mubr.bf16.mxu0 0
    %334 = vmatmul.mubr.bf16.gmra.mrb[0].mxu0 %v223
    %v335 = vpop.f32.mrb[0].mxu0
    %v336 = vadd.f32 %v187, %v335
    %v337 = vpop.f32.mrb[0].mxu0
    %v338 = vpop.f32.mrb[0].mxu0
    %v339 = vadd.f32 %v187, %v338
    %v340 = vpop.f32.mrb[0].mxu0
    %341 = vmatprep.mubr.bf16.mxu0 0
    %342 = vmatmul.mubr.bf16.gmra.mrb[0].mxu0 %v224
    %v343 = vpop.f32.mrb[0].mxu0
    %v344 = vadd.f32 %v187, %v343
    %v345 = vpop.f32.mrb[0].mxu0
    %v346 = vpop.f32.mrb[0].mxu0
    %v347 = vadd.f32 %v187, %v346
    %v348 = vpop.f32.mrb[0].mxu0
    %349 = vmatprep.mubr.bf16.mxu0 0
    %350 = vmatmul.mubr.bf16.gmra.mrb[0].mxu0 %v225
    %v351 = vpop.f32.mrb[0].mxu0
    %v352 = vadd.f32 %v187, %v351
    %v353 = vpop.f32.mrb[0].mxu0
    %v354 = vpop.f32.mrb[0].mxu0
    %v355 = vadd.f32 %v187, %v354
    %v356 = vpop.f32.mrb[0].mxu0
    %357 = vmatprep.mubr.bf16.mxu0 0
    %358 = vmatmul.mubr.bf16.gmra.mrb[0].mxu0 %v226
    %v359 = vpop.f32.mrb[0].mxu0
    %v360 = vadd.f32 %v187, %v359
    %v361 = vpop.f32.mrb[0].mxu0
    %v362 = vpop.f32.mrb[0].mxu0
    %v363 = vadd.f32 %v187, %v362
    %v364 = vpop.f32.mrb[0].mxu0
    %365 = vmatprep.mubr.bf16.mxu0 0
    %366 = vmatmul.mubr.bf16.gmra.mrb[0].mxu0 %v227
    %v367 = vpop.f32.mrb[0].mxu0
    %v368 = vadd.f32 %v187, %v367
    %v369 = vpop.f32.mrb[0].mxu0
    %v370 = vpop.f32.mrb[0].mxu0
    %v371 = vadd.f32 %v187, %v370
    %v372 = vpop.f32.mrb[0].mxu0
    %373 = vmatprep.mubr.bf16.mxu0 0
    %374 = vmatmul.mubr.bf16.gmra.mrb[0].mxu0 %v228
    %v375 = vpop.f32.mrb[0].mxu0
    %v376 = vadd.f32 %v187, %v375
    %v377 = vpop.f32.mrb[0].mxu0
    %v378 = vpop.f32.mrb[0].mxu0
    %v379 = vadd.f32 %v187, %v378
    %v380 = vpop.f32.mrb[0].mxu0
    %381 = vdwg.mxu0
    %v382 = vmax.f32 %v320, 0.0
    %v383 = vmax.f32 %v323, 0.0
    %v384 = vmax.f32 %v328, 0.0
    %v385 = vmax.f32 %v331, 0.0
    %v386 = vmax.f32 %v336, 0.0
    %v387 = vmax.f32 %v339, 0.0
    %v388 = vmax.f32 %v344, 0.0
    %v389 = vmax.f32 %v347, 0.0
    %v390 = vmax.f32 %v352, 0.0
    %v391 = vmax.f32 %v355, 0.0
    %v392 = vmax.f32 %v360, 0.0
    %v393 = vmax.f32 %v363, 0.0
    %v394 = vmax.f32 %v368, 0.0
    %v395 = vmax.f32 %v371, 0.0
    %v396 = vmax.f32 %v376, 0.0
    %v397 = vmax.f32 %v379, 0.0
    %v398 = vpack.c.bf16 %v383, %v382
    %v399 = vpack.c.bf16 %v385, %v384
    %v400 = vpack.c.bf16 %v387, %v386
    %v401 = vpack.c.bf16 %v389, %v388
    %v402 = vpack.c.bf16 %v391, %v390
    %v403 = vpack.c.bf16 %v393, %v392
    %v404 = vpack.c.bf16 %v395, %v394
    %v405 = vpack.c.bf16 %v397, %v396
    %v406 = vld [vmem:[#allocation7] sm:$0xf]
    %v407 = vld [vmem:[#allocation7 + $0x4] sm:$0xf]
    %v408 = vld [vmem:[#allocation7 + $0x8] sm:$0xf]
    %v409 = vld [vmem:[#allocation7 + $0xc] sm:$0xf]
    %v410 = vld [vmem:[#allocation7 + $0x10] sm:$0xf]
    %v411 = vld [vmem:[#allocation7 + $0x14] sm:$0xf]
    %v412 = vld [vmem:[#allocation7 + $0x18] sm:$0xf]
    %v413 = vld [vmem:[#allocation7 + $0x1c] sm:$0xf]
    %v414 = vld [vmem:[#allocation7 + $0x20] sm:$0xf]
    %v415 = vld [vmem:[#allocation7 + $0x24] sm:$0xf]
    %v416 = vld [vmem:[#allocation7 + $0x28] sm:$0xf]
    %v417 = vld [vmem:[#allocation7 + $0x2c] sm:$0xf]
    %v418 = vld [vmem:[#allocation7 + $0x30] sm:$0xf]
    %v419 = vld [vmem:[#allocation7 + $0x34] sm:$0xf]
    %v420 = vld [vmem:[#allocation7 + $0x38] sm:$0xf]
    %v421 = vld [vmem:[#allocation7 + $0x3c] sm:$0xf]
    %v422 = vld [vmem:[#allocation10] sm:$0xf]
    %v423 = vld [vmem:[#allocation10 + $0x4] sm:$0xf]
    %v424 = vld [vmem:[#allocation10 + $0x8] sm:$0xf]
    %v425 = vld [vmem:[#allocation10 + $0xc] sm:$0xf]
    %v426 = vld [vmem:[#allocation10 + $0x10] sm:$0xf]
    %v427 = vld [vmem:[#allocation10 + $0x14] sm:$0xf]
    %v428 = vld [vmem:[#allocation10 + $0x18] sm:$0xf]
    %v429 = vld [vmem:[#allocation10 + $0x1c] sm:$0xf]
    %v430 = vld [vmem:[#allocation10 + $0x20] sm:$0xf]
    %v431 = vld [vmem:[#allocation10 + $0x24] sm:$0xf]
    %v432 = vld [vmem:[#allocation10 + $0x28] sm:$0xf]
    %v433 = vld [vmem:[#allocation10 + $0x2c] sm:$0xf]
    %v434 = vld [vmem:[#allocation10 + $0x30] sm:$0xf]
    %v435 = vld [vmem:[#allocation10 + $0x34] sm:$0xf]
    %v436 = vld [vmem:[#allocation10 + $0x38] sm:$0xf]
    %v437 = vld [vmem:[#allocation10 + $0x3c] sm:$0xf]
    %v439 = vlaneseq
    %v440 = vshrl.u32 %v439, 7
    %v441 = vsub.s32 0, %v440
    %v442 = vrot.slane %v147, %v441
    %v460 = vunpack.c.l.b16 %v406
    %v461 = vunpack.c.l.b16 %v407
    %v462 = vunpack.c.l.b16 %v408
    %v463 = vunpack.c.l.b16 %v409
    %v464 = vunpack.c.l.b16 %v410
    %v465 = vunpack.c.l.b16 %v411
    %v466 = vunpack.c.l.b16 %v412
    %v467 = vunpack.c.l.b16 %v413
    %v468 = vunpack.c.l.b16 %v414
    %v469 = vunpack.c.l.b16 %v415
    %v470 = vunpack.c.l.b16 %v416
    %v471 = vunpack.c.l.b16 %v417
    %v472 = vunpack.c.l.b16 %v418
    %v473 = vunpack.c.l.b16 %v419
    %v474 = vunpack.c.l.b16 %v420
    %v475 = vunpack.c.l.b16 %v421
    %v476 = vpack.c.b16 %v461, %v460
    %v477 = vpack.c.b16 %v463, %v462
    %v478 = vpack.c.b16 %v465, %v464
    %v479 = vpack.c.b16 %v467, %v466
    %v480 = vpack.c.b16 %v469, %v468
    %v481 = vpack.c.b16 %v471, %v470
    %v482 = vpack.c.b16 %v473, %v472
    %v483 = vpack.c.b16 %v475, %v474
    %v508 = vunpack.c.l.b16 %v422
    %v509 = vunpack.c.l.b16 %v423
    %v510 = vunpack.c.l.b16 %v424
    %v511 = vunpack.c.l.b16 %v425
    %v512 = vunpack.c.l.b16 %v426
    %v513 = vunpack.c.l.b16 %v427
    %v514 = vunpack.c.l.b16 %v428
    %v515 = vunpack.c.l.b16 %v429
    %v516 = vunpack.c.l.b16 %v430
    %v517 = vunpack.c.l.b16 %v431
    %v518 = vunpack.c.l.b16 %v432
    %v519 = vunpack.c.l.b16 %v433
    %v520 = vunpack.c.l.b16 %v434
    %v521 = vunpack.c.l.b16 %v435
    %v522 = vunpack.c.l.b16 %v436
    %v523 = vunpack.c.l.b16 %v437
    %v524 = vpack.c.b16 %v509, %v508
    %v525 = vpack.c.b16 %v511, %v510
    %v526 = vpack.c.b16 %v513, %v512
    %v527 = vpack.c.b16 %v515, %v514
    %v528 = vpack.c.b16 %v517, %v516
    %v529 = vpack.c.b16 %v519, %v518
    %v530 = vpack.c.b16 %v521, %v520
    %v531 = vpack.c.b16 %v523, %v522
    %540 = vmatprep.subr.bf16.mxu0 0
    %541 = vmatpush1.bf16.msra.mxu0 %v524
    %542 = vmatprep.subr.bf16.mxu0 0
    %543 = vmatpush1.bf16.msra.mxu0 %v525
    %544 = vmatprep.subr.bf16.mxu0 0
    %545 = vmatpush1.bf16.msra.mxu0 %v526
    %546 = vmatprep.subr.bf16.mxu0 0
    %547 = vmatpush1.bf16.msra.mxu0 %v527
    %548 = vmatprep.subr.bf16.mxu0 0
    %549 = vmatpush1.bf16.msra.mxu0 %v528
    %550 = vmatprep.subr.bf16.mxu0 0
    %551 = vmatpush1.bf16.msra.mxu0 %v529
    %552 = vmatprep.subr.bf16.mxu0 0
    %553 = vmatpush1.bf16.msra.mxu0 %v530
    %554 = vmatprep.subr.bf16.mxu0 0
    %555 = vmatpush1.bf16.msra.mxu0 %v531
    %556 = vmatprep.subr.bf16.mxu0 0
    %557 = vmatpush1.bf16.msra.mxu0 0
    %558 = vmatprep.subr.bf16.mxu0 0
    %559 = vmatpush1.bf16.msra.mxu0 0
    %560 = vmatprep.subr.bf16.mxu0 0
    %561 = vmatpush1.bf16.msra.mxu0 0
    %562 = vmatprep.subr.bf16.mxu0 0
    %563 = vmatpush1.bf16.msra.mxu0 0
    %564 = vmatprep.subr.bf16.mxu0 0
    %565 = vmatpush1.bf16.msra.mxu0 0
    %566 = vmatprep.subr.bf16.mxu0 0
    %567 = vmatpush1.bf16.msra.mxu0 0
    %568 = vmatprep.subr.bf16.mxu0 0
    %569 = vmatpush1.bf16.msra.mxu0 0
    %570 = vmatprep.subr.bf16.mxu0 0
    %571 = vmatpush1.bf16.msra.mxu0 0
    %572 = vmatprep.mubr.bf16.mxu0 0
    %573 = vmatmul.mubr.bf16.gmra.mrb[0].mxu0 %v476
    %v574 = vpop.f32.mrb[0].mxu0
    %v575 = vadd.f32 %v442, %v574
    %v576 = vpop.f32.mrb[0].mxu0
    %v577 = vpop.f32.mrb[0].mxu0
    %v578 = vadd.f32 %v442, %v577
    %v579 = vpop.f32.mrb[0].mxu0
    %580 = vmatprep.mubr.bf16.mxu0 0
    %581 = vmatmul.mubr.bf16.gmra.mrb[0].mxu0 %v477
    %v582 = vpop.f32.mrb[0].mxu0
    %v583 = vadd.f32 %v442, %v582
    %v584 = vpop.f32.mrb[0].mxu0
    %v585 = vpop.f32.mrb[0].mxu0
    %v586 = vadd.f32 %v442, %v585
    %v587 = vpop.f32.mrb[0].mxu0
    %588 = vmatprep.mubr.bf16.mxu0 0
    %589 = vmatmul.mubr.bf16.gmra.mrb[0].mxu0 %v478
    %v590 = vpop.f32.mrb[0].mxu0
    %v591 = vadd.f32 %v442, %v590
    %v592 = vpop.f32.mrb[0].mxu0
    %v593 = vpop.f32.mrb[0].mxu0
    %v594 = vadd.f32 %v442, %v593
    %v595 = vpop.f32.mrb[0].mxu0
    %596 = vmatprep.mubr.bf16.mxu0 0
    %597 = vmatmul.mubr.bf16.gmra.mrb[0].mxu0 %v479
    %v598 = vpop.f32.mrb[0].mxu0
    %v599 = vadd.f32 %v442, %v598
    %v600 = vpop.f32.mrb[0].mxu0
    %v601 = vpop.f32.mrb[0].mxu0
    %v602 = vadd.f32 %v442, %v601
    %v603 = vpop.f32.mrb[0].mxu0
    %604 = vmatprep.mubr.bf16.mxu0 0
    %605 = vmatmul.mubr.bf16.gmra.mrb[0].mxu0 %v480
    %v606 = vpop.f32.mrb[0].mxu0
    %v607 = vadd.f32 %v442, %v606
    %v608 = vpop.f32.mrb[0].mxu0
    %v609 = vpop.f32.mrb[0].mxu0
    %v610 = vadd.f32 %v442, %v609
    %v611 = vpop.f32.mrb[0].mxu0
    %612 = vmatprep.mubr.bf16.mxu0 0
    %613 = vmatmul.mubr.bf16.gmra.mrb[0].mxu0 %v481
    %v614 = vpop.f32.mrb[0].mxu0
    %v615 = vadd.f32 %v442, %v614
    %v616 = vpop.f32.mrb[0].mxu0
    %v617 = vpop.f32.mrb[0].mxu0
    %v618 = vadd.f32 %v442, %v617
    %v619 = vpop.f32.mrb[0].mxu0
    %620 = vmatprep.mubr.bf16.mxu0 0
    %621 = vmatmul.mubr.bf16.gmra.mrb[0].mxu0 %v482
    %v622 = vpop.f32.mrb[0].mxu0
    %v623 = vadd.f32 %v442, %v622
    %v624 = vpop.f32.mrb[0].mxu0
    %v625 = vpop.f32.mrb[0].mxu0
    %v626 = vadd.f32 %v442, %v625
    %v627 = vpop.f32.mrb[0].mxu0
    %628 = vmatprep.mubr.bf16.mxu0 0
    %629 = vmatmul.mubr.bf16.gmra.mrb[0].mxu0 %v483
    %v630 = vpop.f32.mrb[0].mxu0
    %v631 = vadd.f32 %v442, %v630
    %v632 = vpop.f32.mrb[0].mxu0
    %v633 = vpop.f32.mrb[0].mxu0
    %v634 = vadd.f32 %v442, %v633
    %v635 = vpop.f32.mrb[0].mxu0
    %636 = vdwg.mxu0
    %v637 = vld [vmem:[#allocation5] sm:$0xff]
    %v638 = vld [vmem:[#allocation5 + $0x8] sm:$0xff]
    %v639 = vld [vmem:[#allocation5 + $0x10] sm:$0xff]
    %v640 = vld [vmem:[#allocation5 + $0x18] sm:$0xff]
    %v641 = vld [vmem:[#allocation5 + $0x20] sm:$0xff]
    %v642 = vld [vmem:[#allocation5 + $0x28] sm:$0xff]
    %v643 = vld [vmem:[#allocation5 + $0x30] sm:$0xff]
    %v644 = vld [vmem:[#allocation5 + $0x38] sm:$0xff]
    %v645 = vld [vmem:[#allocation5 + $0x40] sm:$0xff]
    %v646 = vld [vmem:[#allocation5 + $0x48] sm:$0xff]
    %v647 = vld [vmem:[#allocation5 + $0x50] sm:$0xff]
    %v648 = vld [vmem:[#allocation5 + $0x58] sm:$0xff]
    %v649 = vld [vmem:[#allocation5 + $0x60] sm:$0xff]
    %v650 = vld [vmem:[#allocation5 + $0x68] sm:$0xff]
    %v651 = vld [vmem:[#allocation5 + $0x70] sm:$0xff]
    %v652 = vld [vmem:[#allocation5 + $0x78] sm:$0xff]
    %v653 = vadd.f32 %v575, %v637
    %v654 = vadd.f32 %v578, %v638
    %v655 = vadd.f32 %v583, %v639
    %v656 = vadd.f32 %v586, %v640
    %v657 = vadd.f32 %v591, %v641
    %v658 = vadd.f32 %v594, %v642
    %v659 = vadd.f32 %v599, %v643
    %v660 = vadd.f32 %v602, %v644
    %v661 = vadd.f32 %v607, %v645
    %v662 = vadd.f32 %v610, %v646
    %v663 = vadd.f32 %v615, %v647
    %v664 = vadd.f32 %v618, %v648
    %v665 = vadd.f32 %v623, %v649
    %v666 = vadd.f32 %v626, %v650
    %v667 = vadd.f32 %v631, %v651
    %v668 = vadd.f32 %v634, %v652
    %v669 = vpack.c.bf16 %v654, %v653
    %v670 = vpack.c.bf16 %v656, %v655
    %v671 = vpack.c.bf16 %v658, %v657
    %v672 = vpack.c.bf16 %v660, %v659
    %v673 = vpack.c.bf16 %v662, %v661
    %v674 = vpack.c.bf16 %v664, %v663
    %v675 = vpack.c.bf16 %v666, %v665
    %v676 = vpack.c.bf16 %v668, %v667
    %v677 = vld [vmem:[#allocation11] sm:$0xf]
    %v678 = vld [vmem:[#allocation11 + $0x4] sm:$0xf]
    %v679 = vld [vmem:[#allocation11 + $0x8] sm:$0xf]
    %v680 = vld [vmem:[#allocation11 + $0xc] sm:$0xf]
    %v681 = vld [vmem:[#allocation11 + $0x10] sm:$0xf]
    %v682 = vld [vmem:[#allocation11 + $0x14] sm:$0xf]
    %v683 = vld [vmem:[#allocation11 + $0x18] sm:$0xf]
    %v684 = vld [vmem:[#allocation11 + $0x1c] sm:$0xf]
    %v685 = vld [vmem:[#allocation11 + $0x20] sm:$0xf]
    %v686 = vld [vmem:[#allocation11 + $0x24] sm:$0xf]
    %v687 = vld [vmem:[#allocation11 + $0x28] sm:$0xf]
    %v688 = vld [vmem:[#allocation11 + $0x2c] sm:$0xf]
    %v689 = vld [vmem:[#allocation11 + $0x30] sm:$0xf]
    %v690 = vld [vmem:[#allocation11 + $0x34] sm:$0xf]
    %v691 = vld [vmem:[#allocation11 + $0x38] sm:$0xf]
    %v692 = vld [vmem:[#allocation11 + $0x3c] sm:$0xf]
    %v693 = vld [vmem:[#allocation13] sm:$0xf]
    %v694 = vld [vmem:[#allocation13 + $0x4] sm:$0xf]
    %v695 = vld [vmem:[#allocation13 + $0x8] sm:$0xf]
    %v696 = vld [vmem:[#allocation13 + $0xc] sm:$0xf]
    %v697 = vld [vmem:[#allocation13 + $0x10] sm:$0xf]
    %v698 = vld [vmem:[#allocation13 + $0x14] sm:$0xf]
    %v699 = vld [vmem:[#allocation13 + $0x18] sm:$0xf]
    %v700 = vld [vmem:[#allocation13 + $0x1c] sm:$0xf]
    %v701 = vld [vmem:[#allocation13 + $0x20] sm:$0xf]
    %v702 = vld [vmem:[#allocation13 + $0x24] sm:$0xf]
    %v703 = vld [vmem:[#allocation13 + $0x28] sm:$0xf]
    %v704 = vld [vmem:[#allocation13 + $0x2c] sm:$0xf]
    %v705 = vld [vmem:[#allocation13 + $0x30] sm:$0xf]
    %v706 = vld [vmem:[#allocation13 + $0x34] sm:$0xf]
    %v707 = vld [vmem:[#allocation13 + $0x38] sm:$0xf]
    %v708 = vld [vmem:[#allocation13 + $0x3c] sm:$0xf]
    %v725 = vunpack.c.l.b16 %v693
    %v726 = vunpack.c.l.b16 %v694
    %v727 = vunpack.c.l.b16 %v695
    %v728 = vunpack.c.l.b16 %v696
    %v729 = vunpack.c.l.b16 %v697
    %v730 = vunpack.c.l.b16 %v698
    %v731 = vunpack.c.l.b16 %v699
    %v732 = vunpack.c.l.b16 %v700
    %v733 = vunpack.c.l.b16 %v701
    %v734 = vunpack.c.l.b16 %v702
    %v735 = vunpack.c.l.b16 %v703
    %v736 = vunpack.c.l.b16 %v704
    %v737 = vunpack.c.l.b16 %v705
    %v738 = vunpack.c.l.b16 %v706
    %v739 = vunpack.c.l.b16 %v707
    %v740 = vunpack.c.l.b16 %v708
    %v741 = vpack.c.b16 %v726, %v725
    %v742 = vpack.c.b16 %v728, %v727
    %v743 = vpack.c.b16 %v730, %v729
    %v744 = vpack.c.b16 %v732, %v731
    %v745 = vpack.c.b16 %v734, %v733
    %v746 = vpack.c.b16 %v736, %v735
    %v747 = vpack.c.b16 %v738, %v737
    %v748 = vpack.c.b16 %v740, %v739
    %757 = vmatprep.subr.bf16.mxu0 0
    %758 = vmatpush1.bf16.msra.mxu0 %v741
    %759 = vmatprep.subr.bf16.mxu0 0
    %760 = vmatpush1.bf16.msra.mxu0 %v742
    %761 = vmatprep.subr.bf16.mxu0 0
    %762 = vmatpush1.bf16.msra.mxu0 %v743
    %763 = vmatprep.subr.bf16.mxu0 0
    %764 = vmatpush1.bf16.msra.mxu0 %v744
    %765 = vmatprep.subr.bf16.mxu0 0
    %766 = vmatpush1.bf16.msra.mxu0 %v745
    %767 = vmatprep.subr.bf16.mxu0 0
    %768 = vmatpush1.bf16.msra.mxu0 %v746
    %769 = vmatprep.subr.bf16.mxu0 0
    %770 = vmatpush1.bf16.msra.mxu0 %v747
    %771 = vmatprep.subr.bf16.mxu0 0
    %772 = vmatpush1.bf16.msra.mxu0 %v748
    %773 = vmatprep.subr.bf16.mxu0 0
    %774 = vmatpush1.bf16.msra.mxu0 0
    %775 = vmatprep.subr.bf16.mxu0 0
    %776 = vmatpush1.bf16.msra.mxu0 0
    %777 = vmatprep.subr.bf16.mxu0 0
    %778 = vmatpush1.bf16.msra.mxu0 0
    %779 = vmatprep.subr.bf16.mxu0 0
    %780 = vmatpush1.bf16.msra.mxu0 0
    %781 = vmatprep.subr.bf16.mxu0 0
    %782 = vmatpush1.bf16.msra.mxu0 0
    %783 = vmatprep.subr.bf16.mxu0 0
    %784 = vmatpush1.bf16.msra.mxu0 0
    %785 = vmatprep.subr.bf16.mxu0 0
    %786 = vmatpush1.bf16.msra.mxu0 0
    %787 = vmatprep.subr.bf16.mxu0 0
    %788 = vmatpush1.bf16.msra.mxu0 0
    %789 = vmatprep.mubr.bf16.mxu0 0
    %790 = vmatmul.mubr.bf16.gmra.mrb[0].mxu0 %v669
    %v791 = vpop.f32.mrb[0].mxu0
    %v792 = vadd.f32 0.0, %v791
    %v793 = vpop.f32.mrb[0].mxu0
    %v794 = vpop.f32.mrb[0].mxu0
    %v795 = vadd.f32 0.0, %v794
    %v796 = vpop.f32.mrb[0].mxu0
    %797 = vmatprep.mubr.bf16.mxu0 0
    %798 = vmatmul.mubr.bf16.gmra.mrb[0].mxu0 %v670
    %v799 = vpop.f32.mrb[0].mxu0
    %v800 = vadd.f32 0.0, %v799
    %v801 = vpop.f32.mrb[0].mxu0
    %v802 = vpop.f32.mrb[0].mxu0
    %v803 = vadd.f32 0.0, %v802
    %v804 = vpop.f32.mrb[0].mxu0
    %805 = vmatprep.mubr.bf16.mxu0 0
    %806 = vmatmul.mubr.bf16.gmra.mrb[0].mxu0 %v671
    %v807 = vpop.f32.mrb[0].mxu0
    %v808 = vadd.f32 0.0, %v807
    %v809 = vpop.f32.mrb[0].mxu0
    %v810 = vpop.f32.mrb[0].mxu0
    %v811 = vadd.f32 0.0, %v810
    %v812 = vpop.f32.mrb[0].mxu0
    %813 = vmatprep.mubr.bf16.mxu0 0
    %814 = vmatmul.mubr.bf16.gmra.mrb[0].mxu0 %v672
    %v815 = vpop.f32.mrb[0].mxu0
    %v816 = vadd.f32 0.0, %v815
    %v817 = vpop.f32.mrb[0].mxu0
    %v818 = vpop.f32.mrb[0].mxu0
    %v819 = vadd.f32 0.0, %v818
    %v820 = vpop.f32.mrb[0].mxu0
    %821 = vmatprep.mubr.bf16.mxu0 0
    %822 = vmatmul.mubr.bf16.gmra.mrb[0].mxu0 %v673
    %v823 = vpop.f32.mrb[0].mxu0
    %v824 = vadd.f32 0.0, %v823
    %v825 = vpop.f32.mrb[0].mxu0
    %v826 = vpop.f32.mrb[0].mxu0
    %v827 = vadd.f32 0.0, %v826
    %v828 = vpop.f32.mrb[0].mxu0
    %829 = vmatprep.mubr.bf16.mxu0 0
    %830 = vmatmul.mubr.bf16.gmra.mrb[0].mxu0 %v674
    %v831 = vpop.f32.mrb[0].mxu0
    %v832 = vadd.f32 0.0, %v831
    %v833 = vpop.f32.mrb[0].mxu0
    %v834 = vpop.f32.mrb[0].mxu0
    %v835 = vadd.f32 0.0, %v834
    %v836 = vpop.f32.mrb[0].mxu0
    %837 = vmatprep.mubr.bf16.mxu0 0
    %838 = vmatmul.mubr.bf16.gmra.mrb[0].mxu0 %v675
    %v839 = vpop.f32.mrb[0].mxu0
    %v840 = vadd.f32 0.0, %v839
    %v841 = vpop.f32.mrb[0].mxu0
    %v842 = vpop.f32.mrb[0].mxu0
    %v843 = vadd.f32 0.0, %v842
    %v844 = vpop.f32.mrb[0].mxu0
    %845 = vmatprep.mubr.bf16.mxu0 0
    %846 = vmatmul.mubr.bf16.gmra.mrb[0].mxu0 %v676
    %v847 = vpop.f32.mrb[0].mxu0
    %v848 = vadd.f32 0.0, %v847
    %v849 = vpop.f32.mrb[0].mxu0
    %v850 = vpop.f32.mrb[0].mxu0
    %v851 = vadd.f32 0.0, %v850
    %v852 = vpop.f32.mrb[0].mxu0
    %853 = vdwg.mxu0
    %v870 = vunpack.c.l.b16 %v677
    %v871 = vunpack.c.l.b16 %v678
    %v872 = vunpack.c.l.b16 %v679
    %v873 = vunpack.c.l.b16 %v680
    %v874 = vunpack.c.l.b16 %v681
    %v875 = vunpack.c.l.b16 %v682
    %v876 = vunpack.c.l.b16 %v683
    %v877 = vunpack.c.l.b16 %v684
    %v878 = vunpack.c.l.b16 %v685
    %v879 = vunpack.c.l.b16 %v686
    %v880 = vunpack.c.l.b16 %v687
    %v881 = vunpack.c.l.b16 %v688
    %v882 = vunpack.c.l.b16 %v689
    %v883 = vunpack.c.l.b16 %v690
    %v884 = vunpack.c.l.b16 %v691
    %v885 = vunpack.c.l.b16 %v692
    %v886 = vpack.c.b16 %v871, %v870
    %v887 = vpack.c.b16 %v873, %v872
    %v888 = vpack.c.b16 %v875, %v874
    %v889 = vpack.c.b16 %v877, %v876
    %v890 = vpack.c.b16 %v879, %v878
    %v891 = vpack.c.b16 %v881, %v880
    %v892 = vpack.c.b16 %v883, %v882
    %v893 = vpack.c.b16 %v885, %v884
    %902 = vmatprep.subr.bf16.mxu0 0
    %903 = vmatpush1.bf16.msra.mxu0 %v886
    %904 = vmatprep.subr.bf16.mxu0 0
    %905 = vmatpush1.bf16.msra.mxu0 %v887
    %906 = vmatprep.subr.bf16.mxu0 0
    %907 = vmatpush1.bf16.msra.mxu0 %v888
    %908 = vmatprep.subr.bf16.mxu0 0
    %909 = vmatpush1.bf16.msra.mxu0 %v889
    %910 = vmatprep.subr.bf16.mxu0 0
    %911 = vmatpush1.bf16.msra.mxu0 %v890
    %912 = vmatprep.subr.bf16.mxu0 0
    %913 = vmatpush1.bf16.msra.mxu0 %v891
    %914 = vmatprep.subr.bf16.mxu0 0
    %915 = vmatpush1.bf16.msra.mxu0 %v892
    %916 = vmatprep.subr.bf16.mxu0 0
    %917 = vmatpush1.bf16.msra.mxu0 %v893
    %918 = vmatprep.subr.bf16.mxu0 0
    %919 = vmatpush1.bf16.msra.mxu0 0
    %920 = vmatprep.subr.bf16.mxu0 0
    %921 = vmatpush1.bf16.msra.mxu0 0
    %922 = vmatprep.subr.bf16.mxu0 0
    %923 = vmatpush1.bf16.msra.mxu0 0
    %924 = vmatprep.subr.bf16.mxu0 0
    %925 = vmatpush1.bf16.msra.mxu0 0
    %926 = vmatprep.subr.bf16.mxu0 0
    %927 = vmatpush1.bf16.msra.mxu0 0
    %928 = vmatprep.subr.bf16.mxu0 0
    %929 = vmatpush1.bf16.msra.mxu0 0
    %930 = vmatprep.subr.bf16.mxu0 0
    %931 = vmatpush1.bf16.msra.mxu0 0
    %932 = vmatprep.subr.bf16.mxu0 0
    %933 = vmatpush1.bf16.msra.mxu0 0
    %934 = vmatprep.mubr.bf16.mxu0 0
    %935 = vmatmul.mubr.bf16.gmra.mrb[0].mxu0 %v398
    %v936 = vpop.f32.mrb[0].mxu0
    %v937 = vadd.f32 %v792, %v936
    %v938 = vpop.f32.mrb[0].mxu0
    %v939 = vpop.f32.mrb[0].mxu0
    %v940 = vadd.f32 %v795, %v939
    %v941 = vpop.f32.mrb[0].mxu0
    %942 = vmatprep.mubr.bf16.mxu0 0
    %943 = vmatmul.mubr.bf16.gmra.mrb[0].mxu0 %v399
    %v944 = vpop.f32.mrb[0].mxu0
    %v945 = vadd.f32 %v800, %v944
    %v946 = vpop.f32.mrb[0].mxu0
    %v947 = vpop.f32.mrb[0].mxu0
    %v948 = vadd.f32 %v803, %v947
    %v949 = vpop.f32.mrb[0].mxu0
    %950 = vmatprep.mubr.bf16.mxu0 0
    %951 = vmatmul.mubr.bf16.gmra.mrb[0].mxu0 %v400
    %v952 = vpop.f32.mrb[0].mxu0
    %v953 = vadd.f32 %v808, %v952
    %v954 = vpop.f32.mrb[0].mxu0
    %v955 = vpop.f32.mrb[0].mxu0
    %v956 = vadd.f32 %v811, %v955
    %v957 = vpop.f32.mrb[0].mxu0
    %958 = vmatprep.mubr.bf16.mxu0 0
    %959 = vmatmul.mubr.bf16.gmra.mrb[0].mxu0 %v401
    %v960 = vpop.f32.mrb[0].mxu0
    %v961 = vadd.f32 %v816, %v960
    %v962 = vpop.f32.mrb[0].mxu0
    %v963 = vpop.f32.mrb[0].mxu0
    %v964 = vadd.f32 %v819, %v963
    %v965 = vpop.f32.mrb[0].mxu0
    %966 = vmatprep.mubr.bf16.mxu0 0
    %967 = vmatmul.mubr.bf16.gmra.mrb[0].mxu0 %v402
    %v968 = vpop.f32.mrb[0].mxu0
    %v969 = vadd.f32 %v824, %v968
    %v970 = vpop.f32.mrb[0].mxu0
    %v971 = vpop.f32.mrb[0].mxu0
    %v972 = vadd.f32 %v827, %v971
    %v973 = vpop.f32.mrb[0].mxu0
    %974 = vmatprep.mubr.bf16.mxu0 0
    %975 = vmatmul.mubr.bf16.gmra.mrb[0].mxu0 %v403
    %v976 = vpop.f32.mrb[0].mxu0
    %v977 = vadd.f32 %v832, %v976
    %v978 = vpop.f32.mrb[0].mxu0
    %v979 = vpop.f32.mrb[0].mxu0
    %v980 = vadd.f32 %v835, %v979
    %v981 = vpop.f32.mrb[0].mxu0
    %982 = vmatprep.mubr.bf16.mxu0 0
    %983 = vmatmul.mubr.bf16.gmra.mrb[0].mxu0 %v404
    %v984 = vpop.f32.mrb[0].mxu0
    %v985 = vadd.f32 %v840, %v984
    %v986 = vpop.f32.mrb[0].mxu0
    %v987 = vpop.f32.mrb[0].mxu0
    %v988 = vadd.f32 %v843, %v987
    %v989 = vpop.f32.mrb[0].mxu0
    %990 = vmatprep.mubr.bf16.mxu0 0
    %991 = vmatmul.mubr.bf16.gmra.mrb[0].mxu0 %v405
    %v992 = vpop.f32.mrb[0].mxu0
    %v993 = vadd.f32 %v848, %v992
    %v994 = vpop.f32.mrb[0].mxu0
    %v995 = vpop.f32.mrb[0].mxu0
    %v996 = vadd.f32 %v851, %v995
    %v997 = vpop.f32.mrb[0].mxu0
    %998 = vdwg.mxu0
    %v1000 = vlaneseq
    %v1001 = vshrl.u32 %v1000, 7
    %v1002 = vsub.s32 0, %v1001
    %v1003 = vrot.slane %v148, %v1002
    %v1005 = vadd.f32 %v937, %v1003
    %v1006 = vadd.f32 %v940, %v1003
    %v1007 = vadd.f32 %v945, %v1003
    %v1008 = vadd.f32 %v948, %v1003
    %v1009 = vadd.f32 %v953, %v1003
    %v1010 = vadd.f32 %v956, %v1003
    %v1011 = vadd.f32 %v961, %v1003
    %v1012 = vadd.f32 %v964, %v1003
    %v1013 = vadd.f32 %v969, %v1003
    %v1014 = vadd.f32 %v972, %v1003
    %v1015 = vadd.f32 %v977, %v1003
    %v1016 = vadd.f32 %v980, %v1003
    %v1017 = vadd.f32 %v985, %v1003
    %v1018 = vadd.f32 %v988, %v1003
    %v1019 = vadd.f32 %v993, %v1003
    %v1020 = vadd.f32 %v996, %v1003
    %v1021 = vmax.f32 %v1005, 0.0
    %v1022 = vmax.f32 %v1006, 0.0
    %v1023 = vmax.f32 %v1007, 0.0
    %v1024 = vmax.f32 %v1008, 0.0
    %v1025 = vmax.f32 %v1009, 0.0
    %v1026 = vmax.f32 %v1010, 0.0
    %v1027 = vmax.f32 %v1011, 0.0
    %v1028 = vmax.f32 %v1012, 0.0
    %v1029 = vmax.f32 %v1013, 0.0
    %v1030 = vmax.f32 %v1014, 0.0
    %v1031 = vmax.f32 %v1015, 0.0
    %v1032 = vmax.f32 %v1016, 0.0
    %v1033 = vmax.f32 %v1017, 0.0
    %v1034 = vmax.f32 %v1018, 0.0
    %v1035 = vmax.f32 %v1019, 0.0
    %v1036 = vmax.f32 %v1020, 0.0
    %v1037 = vpack.c.bf16 %v1022, %v1021
    %v1038 = vpack.c.bf16 %v1024, %v1023
    %v1039 = vpack.c.bf16 %v1026, %v1025
    %v1040 = vpack.c.bf16 %v1028, %v1027
    %v1041 = vpack.c.bf16 %v1030, %v1029
    %v1042 = vpack.c.bf16 %v1032, %v1031
    %v1043 = vpack.c.bf16 %v1034, %v1033
    %v1044 = vpack.c.bf16 %v1036, %v1035
    %v1045 = vld [vmem:[#allocation14] sm:$0xf]
    %v1046 = vld [vmem:[#allocation14 + $0x4] sm:$0xf]
    %v1047 = vld [vmem:[#allocation14 + $0x8] sm:$0xf]
    %v1048 = vld [vmem:[#allocation14 + $0xc] sm:$0xf]
    %v1049 = vld [vmem:[#allocation14 + $0x10] sm:$0xf]
    %v1050 = vld [vmem:[#allocation14 + $0x14] sm:$0xf]
    %v1051 = vld [vmem:[#allocation14 + $0x18] sm:$0xf]
    %v1052 = vld [vmem:[#allocation14 + $0x1c] sm:$0xf]
    %v1053 = vld [vmem:[#allocation14 + $0x20] sm:$0xf]
    %v1054 = vld [vmem:[#allocation14 + $0x24] sm:$0xf]
    %v1055 = vld [vmem:[#allocation14 + $0x28] sm:$0xf]
    %v1056 = vld [vmem:[#allocation14 + $0x2c] sm:$0xf]
    %v1057 = vld [vmem:[#allocation14 + $0x30] sm:$0xf]
    %v1058 = vld [vmem:[#allocation14 + $0x34] sm:$0xf]
    %v1059 = vld [vmem:[#allocation14 + $0x38] sm:$0xf]
    %v1060 = vld [vmem:[#allocation14 + $0x3c] sm:$0xf]
    %v1062 = vlaneseq
    %v1063 = vshrl.u32 %v1062, 7
    %v1064 = vsub.s32 0, %v1063
    %v1065 = vrot.slane %v149, %v1064
    %v1083 = vunpack.c.l.b16 %v1045
    %v1084 = vunpack.c.l.b16 %v1046
    %v1085 = vunpack.c.l.b16 %v1047
    %v1086 = vunpack.c.l.b16 %v1048
    %v1087 = vunpack.c.l.b16 %v1049
    %v1088 = vunpack.c.l.b16 %v1050
    %v1089 = vunpack.c.l.b16 %v1051
    %v1090 = vunpack.c.l.b16 %v1052
    %v1091 = vunpack.c.l.b16 %v1053
    %v1092 = vunpack.c.l.b16 %v1054
    %v1093 = vunpack.c.l.b16 %v1055
    %v1094 = vunpack.c.l.b16 %v1056
    %v1095 = vunpack.c.l.b16 %v1057
    %v1096 = vunpack.c.l.b16 %v1058
    %v1097 = vunpack.c.l.b16 %v1059
    %v1098 = vunpack.c.l.b16 %v1060
    %v1099 = vpack.c.b16 %v1084, %v1083
    %v1100 = vpack.c.b16 %v1086, %v1085
    %v1101 = vpack.c.b16 %v1088, %v1087
    %v1102 = vpack.c.b16 %v1090, %v1089
    %v1103 = vpack.c.b16 %v1092, %v1091
    %v1104 = vpack.c.b16 %v1094, %v1093
    %v1105 = vpack.c.b16 %v1096, %v1095
    %v1106 = vpack.c.b16 %v1098, %v1097
    %1115 = vmatprep.subr.bf16.mxu0 0
    %1116 = vmatpush1.bf16.msra.mxu0 %v1099
    %1117 = vmatprep.subr.bf16.mxu0 0
    %1118 = vmatpush1.bf16.msra.mxu0 %v1100
    %1119 = vmatprep.subr.bf16.mxu0 0
    %1120 = vmatpush1.bf16.msra.mxu0 %v1101
    %1121 = vmatprep.subr.bf16.mxu0 0
    %1122 = vmatpush1.bf16.msra.mxu0 %v1102
    %1123 = vmatprep.subr.bf16.mxu0 0
    %1124 = vmatpush1.bf16.msra.mxu0 %v1103
    %1125 = vmatprep.subr.bf16.mxu0 0
    %1126 = vmatpush1.bf16.msra.mxu0 %v1104
    %1127 = vmatprep.subr.bf16.mxu0 0
    %1128 = vmatpush1.bf16.msra.mxu0 %v1105
    %1129 = vmatprep.subr.bf16.mxu0 0
    %1130 = vmatpush1.bf16.msra.mxu0 %v1106
    %1131 = vmatprep.subr.bf16.mxu0 0
    %1132 = vmatpush1.bf16.msra.mxu0 0
    %1133 = vmatprep.subr.bf16.mxu0 0
    %1134 = vmatpush1.bf16.msra.mxu0 0
    %1135 = vmatprep.subr.bf16.mxu0 0
    %1136 = vmatpush1.bf16.msra.mxu0 0
    %1137 = vmatprep.subr.bf16.mxu0 0
    %1138 = vmatpush1.bf16.msra.mxu0 0
    %1139 = vmatprep.subr.bf16.mxu0 0
    %1140 = vmatpush1.bf16.msra.mxu0 0
    %1141 = vmatprep.subr.bf16.mxu0 0
    %1142 = vmatpush1.bf16.msra.mxu0 0
    %1143 = vmatprep.subr.bf16.mxu0 0
    %1144 = vmatpush1.bf16.msra.mxu0 0
    %1145 = vmatprep.subr.bf16.mxu0 0
    %1146 = vmatpush1.bf16.msra.mxu0 0
    %1147 = vmatprep.mubr.bf16.mxu0 0
    %1148 = vmatmul.mubr.bf16.gmra.mrb[0].mxu0 %v1037
    %v1149 = vpop.f32.mrb[0].mxu0
    %v1150 = vadd.f32 %v1065, %v1149
    %v1151 = vpop.f32.mrb[0].mxu0
    %v1152 = vpop.f32.mrb[0].mxu0
    %v1153 = vadd.f32 %v1065, %v1152
    %v1154 = vpop.f32.mrb[0].mxu0
    %1155 = vmatprep.mubr.bf16.mxu0 0
    %1156 = vmatmul.mubr.bf16.gmra.mrb[0].mxu0 %v1038
    %v1157 = vpop.f32.mrb[0].mxu0
    %v1158 = vadd.f32 %v1065, %v1157
    %v1159 = vpop.f32.mrb[0].mxu0
    %v1160 = vpop.f32.mrb[0].mxu0
    %v1161 = vadd.f32 %v1065, %v1160
    %v1162 = vpop.f32.mrb[0].mxu0
    %1163 = vmatprep.mubr.bf16.mxu0 0
    %1164 = vmatmul.mubr.bf16.gmra.mrb[0].mxu0 %v1039
    %v1165 = vpop.f32.mrb[0].mxu0
    %v1166 = vadd.f32 %v1065, %v1165
    %v1167 = vpop.f32.mrb[0].mxu0
    %v1168 = vpop.f32.mrb[0].mxu0
    %v1169 = vadd.f32 %v1065, %v1168
    %v1170 = vpop.f32.mrb[0].mxu0
    %1171 = vmatprep.mubr.bf16.mxu0 0
    %1172 = vmatmul.mubr.bf16.gmra.mrb[0].mxu0 %v1040
    %v1173 = vpop.f32.mrb[0].mxu0
    %v1174 = vadd.f32 %v1065, %v1173
    %v1175 = vpop.f32.mrb[0].mxu0
    %v1176 = vpop.f32.mrb[0].mxu0
    %v1177 = vadd.f32 %v1065, %v1176
    %v1178 = vpop.f32.mrb[0].mxu0
    %1179 = vmatprep.mubr.bf16.mxu0 0
    %1180 = vmatmul.mubr.bf16.gmra.mrb[0].mxu0 %v1041
    %v1181 = vpop.f32.mrb[0].mxu0
    %v1182 = vadd.f32 %v1065, %v1181
    %v1183 = vpop.f32.mrb[0].mxu0
    %v1184 = vpop.f32.mrb[0].mxu0
    %v1185 = vadd.f32 %v1065, %v1184
    %v1186 = vpop.f32.mrb[0].mxu0
    %1187 = vmatprep.mubr.bf16.mxu0 0
    %1188 = vmatmul.mubr.bf16.gmra.mrb[0].mxu0 %v1042
    %v1189 = vpop.f32.mrb[0].mxu0
    %v1190 = vadd.f32 %v1065, %v1189
    %v1191 = vpop.f32.mrb[0].mxu0
    %v1192 = vpop.f32.mrb[0].mxu0
    %v1193 = vadd.f32 %v1065, %v1192
    %v1194 = vpop.f32.mrb[0].mxu0
    %1195 = vmatprep.mubr.bf16.mxu0 0
    %1196 = vmatmul.mubr.bf16.gmra.mrb[0].mxu0 %v1043
    %v1197 = vpop.f32.mrb[0].mxu0
    %v1198 = vadd.f32 %v1065, %v1197
    %v1199 = vpop.f32.mrb[0].mxu0
    %v1200 = vpop.f32.mrb[0].mxu0
    %v1201 = vadd.f32 %v1065, %v1200
    %v1202 = vpop.f32.mrb[0].mxu0
    %1203 = vmatprep.mubr.bf16.mxu0 0
    %1204 = vmatmul.mubr.bf16.gmra.mrb[0].mxu0 %v1044
    %v1205 = vpop.f32.mrb[0].mxu0
    %v1206 = vadd.f32 %v1065, %v1205
    %v1207 = vpop.f32.mrb[0].mxu0
    %v1208 = vpop.f32.mrb[0].mxu0
    %v1209 = vadd.f32 %v1065, %v1208
    %v1210 = vpop.f32.mrb[0].mxu0
    %1211 = vdwg.mxu0
    %v1212 = vmax.f32 %v1150, 0.0
    %v1213 = vmax.f32 %v1153, 0.0
    %v1214 = vmax.f32 %v1158, 0.0
    %v1215 = vmax.f32 %v1161, 0.0
    %v1216 = vmax.f32 %v1166, 0.0
    %v1217 = vmax.f32 %v1169, 0.0
    %v1218 = vmax.f32 %v1174, 0.0
    %v1219 = vmax.f32 %v1177, 0.0
    %v1220 = vmax.f32 %v1182, 0.0
    %v1221 = vmax.f32 %v1185, 0.0
    %v1222 = vmax.f32 %v1190, 0.0
    %v1223 = vmax.f32 %v1193, 0.0
    %v1224 = vmax.f32 %v1198, 0.0
    %v1225 = vmax.f32 %v1201, 0.0
    %v1226 = vmax.f32 %v1206, 0.0
    %v1227 = vmax.f32 %v1209, 0.0
    %v1228 = vpack.c.bf16 %v1213, %v1212
    %v1229 = vpack.c.bf16 %v1215, %v1214
    %v1230 = vpack.c.bf16 %v1217, %v1216
    %v1231 = vpack.c.bf16 %v1219, %v1218
    %v1232 = vpack.c.bf16 %v1221, %v1220
    %v1233 = vpack.c.bf16 %v1223, %v1222
    %v1234 = vpack.c.bf16 %v1225, %v1224
    %v1235 = vpack.c.bf16 %v1227, %v1226
    %v1236 = vld [vmem:[%s8] sm:$0x1]
    %1238 = vset.pattern.permute.xlu0 0
    %1239 = vperm.xlu0 %1238, %v150
    %v1240 = vpop.permute.xlu0 %1239
    %v1242 = vlaneseq
    %v1243 = vshrl.u32 %v1242, 7
    %v1244 = vsub.s32 0, %v1243
    %v1245 = vrot.slane %v1240, %v1244
    %1246 = vmatprep.subr.bf16.mxu0 0
    %1247 = vmatpush1.bf16.xpose.msra.mxu0 %v1228
    %1248 = vmatprep.subr.bf16.mxu0 0
    %1249 = vmatpush1.bf16.xpose.msra.mxu0 %v1229
    %1250 = vmatprep.subr.bf16.mxu0 0
    %1251 = vmatpush1.bf16.xpose.msra.mxu0 %v1230
    %1252 = vmatprep.subr.bf16.mxu0 0
    %1253 = vmatpush1.bf16.xpose.msra.mxu0 %v1231
    %1254 = vmatprep.subr.bf16.mxu0 0
    %1255 = vmatpush1.bf16.xpose.msra.mxu0 %v1232
    %1256 = vmatprep.subr.bf16.mxu0 0
    %1257 = vmatpush1.bf16.xpose.msra.mxu0 %v1233
    %1258 = vmatprep.subr.bf16.mxu0 0
    %1259 = vmatpush1.bf16.xpose.msra.mxu0 %v1234
    %1260 = vmatprep.subr.bf16.mxu0 0
    %1261 = vmatpush1.bf16.xpose.msra.mxu0 %v1235
    %1262 = vmatprep.subr.bf16.mxu0 0
    %1263 = vmatpush1.bf16.xpose.msra.mxu0 0
    %1264 = vmatprep.subr.bf16.mxu0 0
    %1265 = vmatpush1.bf16.xpose.msra.mxu0 0
    %1266 = vmatprep.subr.bf16.mxu0 0
    %1267 = vmatpush1.bf16.xpose.msra.mxu0 0
    %1268 = vmatprep.subr.bf16.mxu0 0
    %1269 = vmatpush1.bf16.xpose.msra.mxu0 0
    %1270 = vmatprep.subr.bf16.mxu0 0
    %1271 = vmatpush1.bf16.xpose.msra.mxu0 0
    %1272 = vmatprep.subr.bf16.mxu0 0
    %1273 = vmatpush1.bf16.xpose.msra.mxu0 0
    %1274 = vmatprep.subr.bf16.mxu0 0
    %1275 = vmatpush1.bf16.xpose.msra.mxu0 0
    %1276 = vmatprep.subr.bf16.mxu0 0
    %1277 = vmatpush1.bf16.xpose.msra.mxu0 0
    %1278 = vmatprep.mubr.bf16.mxu0 0
    %1279 = vmatmul.mubr.bf16.gmra.mrb[0].mxu0 %v1236
    %v1280 = vpop.f32.mrb[0].mxu0
    %v1281 = vadd.f32 %v1245, %v1280
    %v1282 = vpop.f32.mrb[0].mxu0
    %v1283 = vpop.f32.mrb[0].mxu0
    %v1284 = vpop.f32.mrb[0].mxu0
    %1285 = vdwg.mxu0
    %1286 = vst [vmem:[#allocation16] sm:$0x1] %v1281
    // Predicated region
    $region74: #{tpu_custom_call.1} parent=1 // pred_check
      _
    $region75: #{tpu_custom_call.1} parent=1 // pred_check_branch
      %1288 = sbr.rel (0) target = $region77
    $region76: #{tpu_custom_call.1} parent=1 // pred_region
      %s1290 = ssub.s32 16, 16
      %1291 = vsyncadd [#allocation4], %s1290
      %s1293 = sshll.u32 [#allocation16], 4
      %s1294 = int_to_ptr.vmem [resolvable:$true] %s1293
      %1296 = dma.vmem_to_hbm [thread:$0]  %s1294, 16, %s10, [#allocation4]
    $region77: #{tpu_custom_call.1} parent=1 // pred_fallthru
      _
    // Predicated region
    $region78: #{tpu_custom_call.1} parent=1 // pred_check
      _
    $region79: #{tpu_custom_call.1} parent=1 // pred_check_branch
      %1298 = sbr.rel (0) target = $region81
    $region80: #{tpu_custom_call.1} parent=1 // pred_region
      %1299 = dma.done [#allocation4], 16
    $region81: #{tpu_custom_call.1} parent=1 // pred_fallthru
      _
    %1300 = vsyncpa [#allocation3], 1
    %1301 = vsyncpa [#allocation6], 1
    %1302 = vsyncpa [#allocation9], 1
    %1303 = vsyncpa [#allocation12], 1
    %1304 = vsyncpa [#allocation15], 1
    %1305 = vsyncpa [#allocation4], 1

</llo_original>
